<compile_context>
chip_gen: v7x
topology: tpu7x:2x2x1
jax: 0.10.0
libtpu: 0.0.40
codegen_flags: <defaults>
</compile_context>

<pallas_src>
import functools

import jax
import jax.numpy as jnp
import numpy as np
from jax import lax
from jax.experimental import pallas as pl
from jax.experimental.pallas import tpu as pltpu

jax.config.update("jax_default_matmul_precision", "highest")

# ---- synthetic "configs" (small, consistent with the module's forward) ----
NUM_CHANNELS = 4      # configs.ParamsConfig.NUM_CHANNELS
LATENT_DIMS = 8       # configs.ParamsConfig.LATENT_DIMS
BATCH = 2

_C = NUM_CHANNELS
# (name, C_in, C_out, kernel, stride, padding, dilation, activation)
LAYERS = (
    ("conv5", _C,      8 * _C,  (46, 10), (1, 4), (0, 1), (1, 4), "relu"),
    ("conv4", 8 * _C,  8 * _C,  (5, 5),   (1, 2), (2, 2), (1, 1), "relu"),
    ("conv3", 8 * _C,  8 * _C,  (5, 5),   (2, 1), (2, 2), (1, 1), "relu"),
    ("conv2", 8 * _C,  16 * _C, (6, 6),   (1, 1), (2, 3), (1, 1), "relu"),
    ("conv1", 16 * _C, 1,       (5, 5),   (1, 1), (2, 2), (1, 1), "sigmoid"),
)


# =====================  Pallas kernels  =====================

def _linear_kernel(x_ref, w_ref, b_ref, o_ref):
    o_ref[...] = (
        jnp.dot(x_ref[...], w_ref[...], preferred_element_type=jnp.float32)
        + b_ref[...]
    )


def _convT_row_kernel(x_ref, w_ref, b_ref, o_ref, *, kW, dW, OW, act):
    """One (batch, row-block) tile of a stride-1 rhs-dilated conv (== ConvTranspose2d).

    x_ref: (1, TH, IW_p, K)   height-im2col'd input rows, K = kH * C_in
    w_ref: (kW, K, C_out)     flipped / channel-swapped / repacked weight
    b_ref: (1, C_out)
    o_ref: (1, TH, OW, C_out)
    """
    TH = o_ref.shape[1]
    K = x_ref.shape[3]
    C_out = o_ref.shape[3]

    acc = jnp.zeros((TH * OW, C_out), jnp.float32)
    for kw in range(kW):                                   # static, <= 10 taps
        slab = x_ref[0, :, kw * dW: kw * dW + OW, :]       # (TH, OW, K)
        acc = acc + jnp.dot(slab.reshape(TH * OW, K), w_ref[kw],
                            preferred_element_type=jnp.float32)
    y = acc + b_ref[...]
    if act == "relu":
        y = jnp.maximum(y, 0.0)
    elif act == "sigmoid":
        y = jax.nn.sigmoid(y)
    o_ref[0] = y.reshape(TH, OW, C_out)


# =====================  wrappers  =====================

def linear_pallas(x, w, b):
    return pl.pallas_call(
        _linear_kernel,
        out_shape=jax.ShapeDtypeStruct((x.shape[0], w.shape[1]), jnp.float32),
    )(x, w, b.reshape(1, -1))


def _largest_divisor_le(n, cap):
    for t in range(min(cap, n), 0, -1):
        if n % t == 0:
            return t
    return 1


def conv_transpose_pallas(x_nhwc, wt, bias, *, stride, padding, dilation, act,
                          row_cap=32):
    """PyTorch-semantics ConvTranspose2d (output_padding=0) on an NHWC input."""
    B, H, W, C_in = x_nhwc.shape
    assert wt.shape[0] == C_in
    C_out, kH, kW = wt.shape[1], wt.shape[2], wt.shape[3]
    sH, sW = stride
    pH, pW = padding
    dH, dW = dilation

    # 1) insert stride-1 zeros (lhs dilation).
    H_d = (H - 1) * sH + 1
    W_d = (W - 1) * sW + 1
    if sH == 1 and sW == 1:
        x_d = x_nhwc
    else:
        x_d = jnp.zeros((B, H_d, W_d, C_in), x_nhwc.dtype)
        x_d = x_d.at[:, ::sH, ::sW, :].set(x_nhwc)

    # 2) zero-pad so the transposed conv becomes a VALID stride-1 conv.
    padH = dH * (kH - 1) - pH
    padW = dW * (kW - 1) - pW
    assert padH >= 0 and padW >= 0
    x_pad = jnp.pad(x_d, ((0, 0), (padH, padH), (padW, padW), (0, 0)))
    IH_p, IW_p = x_pad.shape[1], x_pad.shape[2]
    OH = IH_p - dH * (kH - 1)
    OW = IW_p - dW * (kW - 1)

    # 3) fold the kH kernel taps into the contraction dim (height-im2col):
    #    x_rows[b, oh, iw, kh*C_in + c] = x_pad[b, oh + kh*dH, iw, c]
    slabs = [x_pad[:, kh * dH: kh * dH + OH] for kh in range(kH)]
    K = kH * C_in
    x_rows = jnp.stack(slabs, axis=3).reshape(B, OH, IW_p, K)

    # 4) repack weight: flip spatially, swap in/out channels, fold (kh, C_in) -> K.
    #    w_eq[kw, kh*C_in + ci, co] = wt[ci, co, kH-1-kh, kW-1-kw]
    w_eq = jnp.transpose(wt[:, :, ::-1, ::-1], (3, 2, 0, 1)).reshape(kW, K, C_out)
    b2 = bias.reshape(1, C_out).astype(jnp.float32)

    # 5) tile the output rows; last two dims (OW, C_out) stay whole (lane-dense writes).
    TH = _largest_divisor_le(OH, row_cap)
    grid = (B, OH // TH)

    kernel = functools.partial(_convT_row_kernel, kW=kW, dW=dW, OW=OW, act=act)
    return pl.pallas_call(
        kernel,
        out_shape=jax.ShapeDtypeStruct((B, OH, OW, C_out), jnp.float32),
        grid=grid,
        in_specs=[
            pl.BlockSpec((1, TH, IW_p, K), lambda b, r: (b, r, 0, 0)),
            pl.BlockSpec((kW, K, C_out), lambda b, r: (0, 0, 0)),
            pl.BlockSpec((1, C_out), lambda b, r: (0, 0)),
        ],
        out_specs=pl.BlockSpec((1, TH, OW, C_out), lambda b, r: (b, r, 0, 0)),
        compiler_params=pltpu.CompilerParams(
            dimension_semantics=("parallel", "parallel")),
    )(x_rows, w_eq, b2)


# =====================  full SmallDecoder forward (Pallas)  =====================

def small_decoder_forward(z, params):
    B = z.shape[0]
    h = linear_pallas(z, params["fc_w"], params["fc_b"])          # (B, C*50*5)
    h = h.reshape(B, NUM_CHANNELS, 50, -1)                        # NCHW, like .view()
    h = jnp.transpose(h, (0, 2, 3, 1))                            # NHWC for the convs
    for name, cin, cout, k, s, p, d, act in LAYERS:
        h = conv_transpose_pallas(h, params[f"{name}_w"], params[f"{name}_b"],
                                  stride=s, padding=p, dilation=d, act=act)
    return jnp.transpose(h, (0, 3, 1, 2))                         # (B, 1, 190, 100)


# =====================  pure-JAX reference (independent)  =====================

def _conv_transpose_ref(x_nchw, wt, bias, *, stride, padding, dilation):
    """ConvTranspose2d == gradient of Conv2d w.r.t. its input (PyTorch definition)."""
    B, C_in, H, W = x_nchw.shape
    C_out, kH, kW = wt.shape[1], wt.shape[2], wt.shape[3]
    sH, sW = stride
    pH, pW = padding
    dH, dW = dilation
    OH = (H - 1) * sH - 2 * pH + dH * (kH - 1) + 1
    OW = (W - 1) * sW - 2 * pW + dW * (kW - 1) + 1

    def fwd(y):
        return lax.conv_general_dilated(
            y, wt, window_strides=(sH, sW),
            padding=((pH, pH), (pW, pW)), rhs_dilation=(dH, dW),
            dimension_numbers=("NCHW", "OIHW", "NCHW"),
            precision=lax.Precision.HIGHEST)

    y0 = jnp.zeros((B, C_out, OH, OW), x_nchw.dtype)
    _, vjp_fn = jax.vjp(fwd, y0)
    (g,) = vjp_fn(x_nchw)
    return g + bias.reshape(1, C_out, 1, 1)


def small_decoder_forward_ref(z, params):
    B = z.shape[0]
    h = z @ params["fc_w"] + params["fc_b"]
    h = h.reshape(B, NUM_CHANNELS, 50, -1)
    for name, cin, cout, k, s, p, d, act in LAYERS:
        h = _conv_transpose_ref(h, params[f"{name}_w"], params[f"{name}_b"],
                                stride=s, padding=p, dilation=d)
        h = jnp.maximum(h, 0.0) if act == "relu" else jax.nn.sigmoid(h)
    return h


# =====================  deterministic parameter init  =====================

def init_params(key):
    keys = jax.random.split(key, 2 + 2 * len(LAYERS))
    it = iter(keys)

    def u(shape, bound):
        return jax.random.uniform(next(it), shape, jnp.float32, -bound, bound)

    fc_out = NUM_CHANNELS * 50 * 5
    params = {
        "fc_w": u((LATENT_DIMS, fc_out), 1.0 / float(np.sqrt(LATENT_DIMS))),
        "fc_b": u((1, fc_out), 1.0 / float(np.sqrt(LATENT_DIMS))),
    }
    for name, cin, cout, (kh, kw), s, p, d, act in LAYERS:
        fan_in = cin * kh * kw
        params[f"{name}_w"] = u((cin, cout, kh, kw), float(np.sqrt(6.0 / fan_in)))
        params[f"{name}_b"] = u((cout,), 1.0 / float(np.sqrt(fan_in)))
    return params


# =====================  main  =====================

if __name__ == "__main__":
    root = jax.random.PRNGKey(0)
    pkey, zkey = jax.random.split(root)

    params = init_params(pkey)
    z = jax.random.uniform(zkey, (BATCH, LATENT_DIMS), jnp.float32, -1.0, 1.0)

    out = small_decoder_forward(z, params)
    jax.block_until_ready(out)
    assert out.shape == (BATCH, 1, 190, 100), out.shape

    # correctness check against an independent pure-JAX reference (vjp-of-conv).
    ref = small_decoder_forward_ref(z, params)
    np.testing.assert_allclose(np.asarray(out), np.asarray(ref), atol=2e-3, rtol=2e-3)

    print("KERNEL_OK")
</pallas_src>

<mosaic_0001>
module attributes {stable_mosaic.version = 11 : i64} {
  func.func @_linear_kernel(%arg0: memref<2x8xf32, #tpu.memory_space<vmem>>, %arg1: memref<8x1000xf32, #tpu.memory_space<vmem>>, %arg2: memref<1x1000xf32, #tpu.memory_space<vmem>>, %arg3: memref<2x1000xf32, #tpu.memory_space<vmem>>) attributes {dimension_semantics = [], scalar_prefetch = 0 : i64, scratch_operands = 0 : i64, tpu.core_type = #tpu.core_type<tc>} {
    %c0 = arith.constant 0 : index
    %c0_0 = arith.constant 0 : index
    %0 = vector.load %arg0[%c0, %c0_0] : memref<2x8xf32, #tpu.memory_space<vmem>>, vector<2x8xf32>
    %c0_1 = arith.constant 0 : index
    %c0_2 = arith.constant 0 : index
    %1 = vector.load %arg1[%c0_1, %c0_2] : memref<8x1000xf32, #tpu.memory_space<vmem>>, vector<8x1000xf32>
    %cst = arith.constant dense<0.000000e+00> : vector<2x1000xf32>
    %2 = tpu.matmul %0, %1, %cst {dimension_numbers = #tpu.dot_dimension_numbers<[1], [0], [0], [1], [0, 0, 1, 1], [], []>, precision = #tpu.contract_precision<fp32>} : vector<2x8xf32>, vector<8x1000xf32>, vector<2x1000xf32> -> vector<2x1000xf32>
    %c0_3 = arith.constant 0 : index
    %c0_4 = arith.constant 0 : index
    %3 = vector.load %arg2[%c0_3, %c0_4] : memref<1x1000xf32, #tpu.memory_space<vmem>>, vector<1x1000xf32>
    %4 = vector.broadcast %3 : vector<1x1000xf32> to vector<2x1000xf32>
    %5 = arith.addf %2, %4 : vector<2x1000xf32>
    %c0_5 = arith.constant 0 : index
    %c0_6 = arith.constant 0 : index
    %6 = vector.load %arg3[%c0_5, %c0_6] : memref<2x1000xf32, #tpu.memory_space<vmem>>, vector<2x1000xf32>
    tpu.vector_store %arg3[%c0_5, %c0_6], %5 {strides = array<i32>} : memref<2x1000xf32, #tpu.memory_space<vmem>>, vector<2x1000xf32>,
    return
  }
}

</mosaic_0001>

<llo_original>
// kernel: tpu_custom_call.1
$region0: #{tpu_custom_call.1}
  #allocation0 [shape = 'u32[]', space=smem, size = 0x4, offset = 0x4, fixed_abs, tag = 'smem constant byte address 0x4 - core index']
  #allocation1 [shape = 'u32[144,128]{1,0:T(1,128)}', space=vmem, size = 0x12000, scoped, tag = 'internal scratch']
  %s0 = inlined_call_operand.hbm [shape: f32[2,8], index: 0, kind: input, shape index: {}]
  %s1 = inlined_call_operand.hbm [shape: f32[8,1000], index: 1, kind: input, shape index: {}]
  %s2 = inlined_call_operand.hbm [shape: f32[1,1000], index: 2, kind: input, shape index: {}]
  %s3 = inlined_call_operand.hbm [shape: f32[2,1000], index: 3, kind: output, shape index: {}]
  %s4 = sld [smem:[#allocation0]]
  $region34: #{tpu_custom_call.1} parent=0
    _
  %s6 = ssub.s32 1, %s4
  %s7 = scalar_select 0, %s6, %s4
  $region1: #{tpu_custom_call.1} parent=0
    #allocation2 [shape = 'u8[1024]{0}', space=vmem, size = 0x400, scoped, tag = 'input window, operand 0, single buffered']
    #allocation3 [shape = 's32[1]{0}', space=sflag, size = 0x4, scoped, tag = 'scoped memory for tpu_custom_call.1']
    #allocation4 [shape = 's32[1]{0}', space=sflag, size = 0x4, scoped, tag = 'scoped memory for tpu_custom_call.1']
    #allocation5 [shape = 'u8[32768]{0}', space=vmem, size = 0x8000, scoped, tag = 'input window, operand 1, single buffered']
    #allocation6 [shape = 's32[1]{0}', space=sflag, size = 0x4, scoped, tag = 'scoped memory for tpu_custom_call.1']
    #allocation7 [shape = 'u8[4096]{0}', space=vmem, size = 0x1000, scoped, tag = 'input window, operand 2, single buffered']
    #allocation8 [shape = 'u8[8192]{0}', space=vmem, size = 0x2000, scoped, tag = 'output window, operand 0, single buffered']
    %8 = vsyncpa [#allocation3], 0
    %9 = vsyncpa [#allocation6], 0
    %10 = vsyncpa [#allocation4], 0
    // Predicated region
    $region2: #{tpu_custom_call.1} parent=1 // pred_check
      _
    $region3: #{tpu_custom_call.1} parent=1 // pred_check_branch
      %12 = sbr.rel (0) target = $region5
    $region4: #{tpu_custom_call.1} parent=1 // pred_region
      %s14 = ssub.s32 32, 32
      %15 = vsyncadd [#allocation3], %s14
      %s17 = sshll.u32 [#allocation2], 4
      %s18 = int_to_ptr.vmem [resolvable:$true] %s17
      %20 = dma.hbm_to_vmem [thread:$0]  %s0, 32, %s18, [#allocation3]
    $region5: #{tpu_custom_call.1} parent=1 // pred_fallthru
      _
    // Predicated region
    $region6: #{tpu_custom_call.1} parent=1 // pred_check
      _
    $region7: #{tpu_custom_call.1} parent=1 // pred_check_branch
      %22 = sbr.rel (0) target = $region9
    $region8: #{tpu_custom_call.1} parent=1 // pred_region
      %s24 = ssub.s32 1024, 1024
      %25 = vsyncadd [#allocation6], %s24
      %s27 = sshll.u32 [#allocation5], 4
      %s28 = int_to_ptr.vmem [resolvable:$true] %s27
      %30 = dma.hbm_to_vmem [thread:$0]  %s1, 1024, %s28, [#allocation6]
    $region9: #{tpu_custom_call.1} parent=1 // pred_fallthru
      _
    // Predicated region
    $region10: #{tpu_custom_call.1} parent=1 // pred_check
      _
    $region11: #{tpu_custom_call.1} parent=1 // pred_check_branch
      %32 = sbr.rel (0) target = $region13
    $region12: #{tpu_custom_call.1} parent=1 // pred_region
      %s34 = ssub.s32 128, 128
      %35 = vsyncadd [#allocation6], %s34
      %s37 = sshll.u32 [#allocation7], 4
      %s38 = int_to_ptr.vmem [resolvable:$true] %s37
      %40 = dma.hbm_to_vmem [thread:$0]  %s2, 128, %s38, [#allocation6]
    $region13: #{tpu_custom_call.1} parent=1 // pred_fallthru
      _
    // Predicated region
    $region14: #{tpu_custom_call.1} parent=1 // pred_check
      _
    $region15: #{tpu_custom_call.1} parent=1 // pred_check_branch
      %42 = sbr.rel (0) target = $region17
    $region16: #{tpu_custom_call.1} parent=1 // pred_region
      %43 = dma.done [#allocation3], 32
    $region17: #{tpu_custom_call.1} parent=1 // pred_fallthru
      _
    // Predicated region
    $region18: #{tpu_custom_call.1} parent=1 // pred_check
      _
    $region19: #{tpu_custom_call.1} parent=1 // pred_check_branch
      %45 = sbr.rel (0) target = $region21
    $region20: #{tpu_custom_call.1} parent=1 // pred_region
      %46 = dma.done [#allocation6], 1024
    $region21: #{tpu_custom_call.1} parent=1 // pred_fallthru
      _
    // Predicated region
    $region22: #{tpu_custom_call.1} parent=1 // pred_check
      _
    $region23: #{tpu_custom_call.1} parent=1 // pred_check_branch
      %48 = sbr.rel (0) target = $region25
    $region24: #{tpu_custom_call.1} parent=1 // pred_region
      %49 = dma.done [#allocation6], 128
    $region25: #{tpu_custom_call.1} parent=1 // pred_fallthru
      _
    %v50 = vld [vmem:[#allocation2] sm:$0x3]
    %v51 = vld [vmem:[#allocation5] sm:$0xff]
    %v52 = vld [vmem:[#allocation5 + $0x8] sm:$0xff]
    %v53 = vld [vmem:[#allocation5 + $0x10] sm:$0xff]
    %v54 = vld [vmem:[#allocation5 + $0x18] sm:$0xff]
    %v55 = vld [vmem:[#allocation5 + $0x20] sm:$0xff]
    %v56 = vld [vmem:[#allocation5 + $0x28] sm:$0xff]
    %v57 = vld [vmem:[#allocation5 + $0x30] sm:$0xff]
    %v58 = vld [vmem:[#allocation5 + $0x38] sm:$0xff]
    %v59 = vld [vmem:[#allocation7] sm:$0xff]
    %v61 = vlaneseq
    %v62 = vshrl.u32 %v61, 7
    %v63 = vsub.s32 0, %v62
    %v64 = vrot.slane %v59, %v63
    %v65 = vlaneseq
    %v66 = vshrl.u32 %v65, 7
    %v67 = vsub.s32 1, %v66
    %v68 = vrot.slane %v59, %v67
    %v69 = vlaneseq
    %v70 = vshrl.u32 %v69, 7
    %v71 = vsub.s32 2, %v70
    %v72 = vrot.slane %v59, %v71
    %v73 = vlaneseq
    %v74 = vshrl.u32 %v73, 7
    %v75 = vsub.s32 3, %v74
    %v76 = vrot.slane %v59, %v75
    %v77 = vlaneseq
    %v78 = vshrl.u32 %v77, 7
    %v79 = vsub.s32 4, %v78
    %v80 = vrot.slane %v59, %v79
    %v81 = vlaneseq
    %v82 = vshrl.u32 %v81, 7
    %v83 = vsub.s32 5, %v82
    %v84 = vrot.slane %v59, %v83
    %v85 = vlaneseq
    %v86 = vshrl.u32 %v85, 7
    %v87 = vsub.s32 6, %v86
    %v88 = vrot.slane %v59, %v87
    %v89 = vlaneseq
    %v90 = vshrl.u32 %v89, 7
    %v91 = vsub.s32 7, %v90
    %v92 = vrot.slane %v59, %v91
    %vm101 = vcmask 64512
    %v103 = vsel %vm101, %v50, 0
    %v105 = vand.u32 %v52, 4294901760
    %106 = vmatprep.subr.mxu0 %v105
    %v107 = vand.u32 %v51, 4294901760
    %108 = vmatpush1.msra.mxu0 %v107
    %109 = vmatprep.subr.mxu0 0.0
    %110 = vmatpush1.msra.mxu0 0.0
    %111 = vmatprep.subr.mxu0 0.0
    %112 = vmatpush1.msra.mxu0 0.0
    %113 = vmatprep.subr.mxu0 0.0
    %114 = vmatpush1.msra.mxu0 0.0
    %115 = vmatprep.subr.mxu0 0.0
    %116 = vmatpush1.msra.mxu0 0.0
    %117 = vmatprep.subr.mxu0 0.0
    %118 = vmatpush1.msra.mxu0 0.0
    %119 = vmatprep.subr.mxu0 0.0
    %120 = vmatpush1.msra.mxu0 0.0
    %121 = vmatprep.subr.mxu0 0.0
    %122 = vmatpush1.msra.mxu0 0.0
    %123 = vmatprep.subr.mxu0 0.0
    %124 = vmatpush1.msra.mxu0 0.0
    %125 = vmatprep.subr.mxu0 0.0
    %126 = vmatpush1.msra.mxu0 0.0
    %127 = vmatprep.subr.mxu0 0.0
    %128 = vmatpush1.msra.mxu0 0.0
    %129 = vmatprep.subr.mxu0 0.0
    %130 = vmatpush1.msra.mxu0 0.0
    %131 = vmatprep.subr.mxu0 0.0
    %132 = vmatpush1.msra.mxu0 0.0
    %133 = vmatprep.subr.mxu0 0.0
    %134 = vmatpush1.msra.mxu0 0.0
    %135 = vmatprep.subr.mxu0 0.0
    %136 = vmatpush1.msra.mxu0 0.0
    %137 = vmatprep.subr.mxu0 0.0
    %138 = vmatpush1.msra.mxu0 0.0
    %139 = vmatprep.subr.mxu0 0.0
    %140 = vmatpush1.msra.mxu0 0.0
    %141 = vmatprep.subr.mxu0 0.0
    %142 = vmatpush1.msra.mxu0 0.0
    %143 = vmatprep.subr.mxu0 0.0
    %144 = vmatpush1.msra.mxu0 0.0
    %145 = vmatprep.subr.mxu0 0.0
    %146 = vmatpush1.msra.mxu0 0.0
    %147 = vmatprep.subr.mxu0 0.0
    %148 = vmatpush1.msra.mxu0 0.0
    %149 = vmatprep.subr.mxu0 0.0
    %150 = vmatpush1.msra.mxu0 0.0
    %151 = vmatprep.subr.mxu0 0.0
    %152 = vmatpush1.msra.mxu0 0.0
    %153 = vmatprep.subr.mxu0 0.0
    %154 = vmatpush1.msra.mxu0 0.0
    %155 = vmatprep.subr.mxu0 0.0
    %156 = vmatpush1.msra.mxu0 0.0
    %157 = vmatprep.subr.mxu0 0.0
    %158 = vmatpush1.msra.mxu0 0.0
    %159 = vmatprep.subr.mxu0 0.0
    %160 = vmatpush1.msra.mxu0 0.0
    %161 = vmatprep.subr.mxu0 0.0
    %162 = vmatpush1.msra.mxu0 0.0
    %163 = vmatprep.subr.mxu0 0.0
    %164 = vmatpush1.msra.mxu0 0.0
    %165 = vmatprep.subr.mxu0 0.0
    %166 = vmatpush1.msra.mxu0 0.0
    %167 = vmatprep.subr.mxu0 0.0
    %168 = vmatpush1.msra.mxu0 0.0
    %169 = vmatprep.subr.mxu0 0.0
    %170 = vmatpush1.msra.mxu0 0.0
    %171 = vmatprep.mubr.f32.mxu0 0.0
    %v172 = vand.u32 %v103, 4294901760
    %v173 = vsub.f32 %v103, %v172
    %v174 = vand.u32 %v173, 4294901760
    %v175 = vsub.f32 %v173, %v174
    %v176 = vand.u32 %v175, 4294901760
    %177 = vmatmul.mubr.f32.gmra.mrb[0].mxu0 %v176
    %v178 = vpop.f32.mrb[0].mxu0
    %v179 = vadd.f32 %v64, %v178
    %v180 = vpop.f32.mrb[0].mxu0
    %v181 = vadd.f32 %v68, %v180
    %182 = vdwg.mxu0
    %v183 = vand.u32 %v52, 4294901760
    %v184 = vsub.f32 %v52, %v183
    %v185 = vand.u32 %v184, 4294901760
    %v186 = vsub.f32 %v184, %v185
    %v187 = vand.u32 %v186, 4294901760
    %188 = vmatprep.subr.mxu0 %v187
    %v189 = vand.u32 %v51, 4294901760
    %v190 = vsub.f32 %v51, %v189
    %v191 = vand.u32 %v190, 4294901760
    %v192 = vsub.f32 %v190, %v191
    %v193 = vand.u32 %v192, 4294901760
    %194 = vmatpush1.msra.mxu0 %v193
    %195 = vmatprep.subr.mxu0 0.0
    %196 = vmatpush1.msra.mxu0 0.0
    %197 = vmatprep.subr.mxu0 0.0
    %198 = vmatpush1.msra.mxu0 0.0
    %199 = vmatprep.subr.mxu0 0.0
    %200 = vmatpush1.msra.mxu0 0.0
    %201 = vmatprep.subr.mxu0 0.0
    %202 = vmatpush1.msra.mxu0 0.0
    %203 = vmatprep.subr.mxu0 0.0
    %204 = vmatpush1.msra.mxu0 0.0
    %205 = vmatprep.subr.mxu0 0.0
    %206 = vmatpush1.msra.mxu0 0.0
    %207 = vmatprep.subr.mxu0 0.0
    %208 = vmatpush1.msra.mxu0 0.0
    %209 = vmatprep.subr.mxu0 0.0
    %210 = vmatpush1.msra.mxu0 0.0
    %211 = vmatprep.subr.mxu0 0.0
    %212 = vmatpush1.msra.mxu0 0.0
    %213 = vmatprep.subr.mxu0 0.0
    %214 = vmatpush1.msra.mxu0 0.0
    %215 = vmatprep.subr.mxu0 0.0
    %216 = vmatpush1.msra.mxu0 0.0
    %217 = vmatprep.subr.mxu0 0.0
    %218 = vmatpush1.msra.mxu0 0.0
    %219 = vmatprep.subr.mxu0 0.0
    %220 = vmatpush1.msra.mxu0 0.0
    %221 = vmatprep.subr.mxu0 0.0
    %222 = vmatpush1.msra.mxu0 0.0
    %223 = vmatprep.subr.mxu0 0.0
    %224 = vmatpush1.msra.mxu0 0.0
    %225 = vmatprep.subr.mxu0 0.0
    %226 = vmatpush1.msra.mxu0 0.0
    %227 = vmatprep.subr.mxu0 0.0
    %228 = vmatpush1.msra.mxu0 0.0
    %229 = vmatprep.subr.mxu0 0.0
    %230 = vmatpush1.msra.mxu0 0.0
    %231 = vmatprep.subr.mxu0 0.0
    %232 = vmatpush1.msra.mxu0 0.0
    %233 = vmatprep.subr.mxu0 0.0
    %234 = vmatpush1.msra.mxu0 0.0
    %235 = vmatprep.subr.mxu0 0.0
    %236 = vmatpush1.msra.mxu0 0.0
    %237 = vmatprep.subr.mxu0 0.0
    %238 = vmatpush1.msra.mxu0 0.0
    %239 = vmatprep.subr.mxu0 0.0
    %240 = vmatpush1.msra.mxu0 0.0
    %241 = vmatprep.subr.mxu0 0.0
    %242 = vmatpush1.msra.mxu0 0.0
    %243 = vmatprep.subr.mxu0 0.0
    %244 = vmatpush1.msra.mxu0 0.0
    %245 = vmatprep.subr.mxu0 0.0
    %246 = vmatpush1.msra.mxu0 0.0
    %247 = vmatprep.subr.mxu0 0.0
    %248 = vmatpush1.msra.mxu0 0.0
    %249 = vmatprep.subr.mxu0 0.0
    %250 = vmatpush1.msra.mxu0 0.0
    %251 = vmatprep.subr.mxu0 0.0
    %252 = vmatpush1.msra.mxu0 0.0
    %253 = vmatprep.subr.mxu0 0.0
    %254 = vmatpush1.msra.mxu0 0.0
    %255 = vmatprep.subr.mxu0 0.0
    %256 = vmatpush1.msra.mxu0 0.0
    %257 = vmatprep.mubr.f32.mxu0 0.0
    %v258 = vand.u32 %v103, 4294901760
    %259 = vmatmul.mubr.f32.gmra.mrb[0].mxu0 %v258
    %v260 = vpop.f32.mrb[0].mxu0
    %v261 = vadd.f32 %v179, %v260
    %v262 = vpop.f32.mrb[0].mxu0
    %v263 = vadd.f32 %v181, %v262
    %264 = vdwg.mxu0
    %v265 = vand.u32 %v52, 4294901760
    %v266 = vsub.f32 %v52, %v265
    %267 = vmatprep.subr.mxu0 %v266
    %v268 = vand.u32 %v51, 4294901760
    %v269 = vsub.f32 %v51, %v268
    %270 = vmatpush1.msra.mxu0 %v269
    %271 = vmatprep.subr.mxu0 0.0
    %272 = vmatpush1.msra.mxu0 0.0
    %273 = vmatprep.subr.mxu0 0.0
    %274 = vmatpush1.msra.mxu0 0.0
    %275 = vmatprep.subr.mxu0 0.0
    %276 = vmatpush1.msra.mxu0 0.0
    %277 = vmatprep.subr.mxu0 0.0
    %278 = vmatpush1.msra.mxu0 0.0
    %279 = vmatprep.subr.mxu0 0.0
    %280 = vmatpush1.msra.mxu0 0.0
    %281 = vmatprep.subr.mxu0 0.0
    %282 = vmatpush1.msra.mxu0 0.0
    %283 = vmatprep.subr.mxu0 0.0
    %284 = vmatpush1.msra.mxu0 0.0
    %285 = vmatprep.subr.mxu0 0.0
    %286 = vmatpush1.msra.mxu0 0.0
    %287 = vmatprep.subr.mxu0 0.0
    %288 = vmatpush1.msra.mxu0 0.0
    %289 = vmatprep.subr.mxu0 0.0
    %290 = vmatpush1.msra.mxu0 0.0
    %291 = vmatprep.subr.mxu0 0.0
    %292 = vmatpush1.msra.mxu0 0.0
    %293 = vmatprep.subr.mxu0 0.0
    %294 = vmatpush1.msra.mxu0 0.0
    %295 = vmatprep.subr.mxu0 0.0
    %296 = vmatpush1.msra.mxu0 0.0
    %297 = vmatprep.subr.mxu0 0.0
    %298 = vmatpush1.msra.mxu0 0.0
    %299 = vmatprep.subr.mxu0 0.0
    %300 = vmatpush1.msra.mxu0 0.0
    %301 = vmatprep.subr.mxu0 0.0
    %302 = vmatpush1.msra.mxu0 0.0
    %303 = vmatprep.subr.mxu0 0.0
    %304 = vmatpush1.msra.mxu0 0.0
    %305 = vmatprep.subr.mxu0 0.0
    %306 = vmatpush1.msra.mxu0 0.0
    %307 = vmatprep.subr.mxu0 0.0
    %308 = vmatpush1.msra.mxu0 0.0
    %309 = vmatprep.subr.mxu0 0.0
    %310 = vmatpush1.msra.mxu0 0.0
    %311 = vmatprep.subr.mxu0 0.0
    %312 = vmatpush1.msra.mxu0 0.0
    %313 = vmatprep.subr.mxu0 0.0
    %314 = vmatpush1.msra.mxu0 0.0
    %315 = vmatprep.subr.mxu0 0.0
    %316 = vmatpush1.msra.mxu0 0.0
    %317 = vmatprep.subr.mxu0 0.0
    %318 = vmatpush1.msra.mxu0 0.0
    %319 = vmatprep.subr.mxu0 0.0
    %320 = vmatpush1.msra.mxu0 0.0
    %321 = vmatprep.subr.mxu0 0.0
    %322 = vmatpush1.msra.mxu0 0.0
    %323 = vmatprep.subr.mxu0 0.0
    %324 = vmatpush1.msra.mxu0 0.0
    %325 = vmatprep.subr.mxu0 0.0
    %326 = vmatpush1.msra.mxu0 0.0
    %327 = vmatprep.subr.mxu0 0.0
    %328 = vmatpush1.msra.mxu0 0.0
    %329 = vmatprep.subr.mxu0 0.0
    %330 = vmatpush1.msra.mxu0 0.0
    %331 = vmatprep.subr.mxu0 0.0
    %332 = vmatpush1.msra.mxu0 0.0
    %333 = vmatprep.mubr.f32.mxu0 0.0
    %v334 = vand.u32 %v103, 4294901760
    %v335 = vsub.f32 %v103, %v334
    %336 = vmatmul.mubr.f32.gmra.mrb[0].mxu0 %v335
    %v337 = vpop.f32.mrb[0].mxu0
    %v338 = vadd.f32 %v261, %v337
    %v339 = vpop.f32.mrb[0].mxu0
    %v340 = vadd.f32 %v263, %v339
    %341 = vdwg.mxu0
    %v342 = vand.u32 %v52, 4294901760
    %343 = vmatprep.subr.mxu0 %v342
    %v344 = vand.u32 %v51, 4294901760
    %345 = vmatpush1.msra.mxu0 %v344
    %346 = vmatprep.subr.mxu0 0.0
    %347 = vmatpush1.msra.mxu0 0.0
    %348 = vmatprep.subr.mxu0 0.0
    %349 = vmatpush1.msra.mxu0 0.0
    %350 = vmatprep.subr.mxu0 0.0
    %351 = vmatpush1.msra.mxu0 0.0
    %352 = vmatprep.subr.mxu0 0.0
    %353 = vmatpush1.msra.mxu0 0.0
    %354 = vmatprep.subr.mxu0 0.0
    %355 = vmatpush1.msra.mxu0 0.0
    %356 = vmatprep.subr.mxu0 0.0
    %357 = vmatpush1.msra.mxu0 0.0
    %358 = vmatprep.subr.mxu0 0.0
    %359 = vmatpush1.msra.mxu0 0.0
    %360 = vmatprep.subr.mxu0 0.0
    %361 = vmatpush1.msra.mxu0 0.0
    %362 = vmatprep.subr.mxu0 0.0
    %363 = vmatpush1.msra.mxu0 0.0
    %364 = vmatprep.subr.mxu0 0.0
    %365 = vmatpush1.msra.mxu0 0.0
    %366 = vmatprep.subr.mxu0 0.0
    %367 = vmatpush1.msra.mxu0 0.0
    %368 = vmatprep.subr.mxu0 0.0
    %369 = vmatpush1.msra.mxu0 0.0
    %370 = vmatprep.subr.mxu0 0.0
    %371 = vmatpush1.msra.mxu0 0.0
    %372 = vmatprep.subr.mxu0 0.0
    %373 = vmatpush1.msra.mxu0 0.0
    %374 = vmatprep.subr.mxu0 0.0
    %375 = vmatpush1.msra.mxu0 0.0
    %376 = vmatprep.subr.mxu0 0.0
    %377 = vmatpush1.msra.mxu0 0.0
    %378 = vmatprep.subr.mxu0 0.0
    %379 = vmatpush1.msra.mxu0 0.0
    %380 = vmatprep.subr.mxu0 0.0
    %381 = vmatpush1.msra.mxu0 0.0
    %382 = vmatprep.subr.mxu0 0.0
    %383 = vmatpush1.msra.mxu0 0.0
    %384 = vmatprep.subr.mxu0 0.0
    %385 = vmatpush1.msra.mxu0 0.0
    %386 = vmatprep.subr.mxu0 0.0
    %387 = vmatpush1.msra.mxu0 0.0
    %388 = vmatprep.subr.mxu0 0.0
    %389 = vmatpush1.msra.mxu0 0.0
    %390 = vmatprep.subr.mxu0 0.0
    %391 = vmatpush1.msra.mxu0 0.0
    %392 = vmatprep.subr.mxu0 0.0
    %393 = vmatpush1.msra.mxu0 0.0
    %394 = vmatprep.subr.mxu0 0.0
    %395 = vmatpush1.msra.mxu0 0.0
    %396 = vmatprep.subr.mxu0 0.0
    %397 = vmatpush1.msra.mxu0 0.0
    %398 = vmatprep.subr.mxu0 0.0
    %399 = vmatpush1.msra.mxu0 0.0
    %400 = vmatprep.subr.mxu0 0.0
    %401 = vmatpush1.msra.mxu0 0.0
    %402 = vmatprep.subr.mxu0 0.0
    %403 = vmatpush1.msra.mxu0 0.0
    %404 = vmatprep.subr.mxu0 0.0
    %405 = vmatpush1.msra.mxu0 0.0
    %406 = vmatprep.subr.mxu0 0.0
    %407 = vmatpush1.msra.mxu0 0.0
    %408 = vmatprep.mubr.f32.mxu0 0.0
    %v409 = vand.u32 %v103, 4294901760
    %v410 = vsub.f32 %v103, %v409
    %v411 = vand.u32 %v410, 4294901760
    %412 = vmatmul.mubr.f32.gmra.mrb[0].mxu0 %v411
    %v413 = vpop.f32.mrb[0].mxu0
    %v414 = vadd.f32 %v338, %v413
    %v415 = vpop.f32.mrb[0].mxu0
    %v416 = vadd.f32 %v340, %v415
    %417 = vdwg.mxu0
    %v418 = vand.u32 %v52, 4294901760
    %v419 = vsub.f32 %v52, %v418
    %v420 = vand.u32 %v419, 4294901760
    %421 = vmatprep.subr.mxu0 %v420
    %v422 = vand.u32 %v51, 4294901760
    %v423 = vsub.f32 %v51, %v422
    %v424 = vand.u32 %v423, 4294901760
    %425 = vmatpush1.msra.mxu0 %v424
    %426 = vmatprep.subr.mxu0 0.0
    %427 = vmatpush1.msra.mxu0 0.0
    %428 = vmatprep.subr.mxu0 0.0
    %429 = vmatpush1.msra.mxu0 0.0
    %430 = vmatprep.subr.mxu0 0.0
    %431 = vmatpush1.msra.mxu0 0.0
    %432 = vmatprep.subr.mxu0 0.0
    %433 = vmatpush1.msra.mxu0 0.0
    %434 = vmatprep.subr.mxu0 0.0
    %435 = vmatpush1.msra.mxu0 0.0
    %436 = vmatprep.subr.mxu0 0.0
    %437 = vmatpush1.msra.mxu0 0.0
    %438 = vmatprep.subr.mxu0 0.0
    %439 = vmatpush1.msra.mxu0 0.0
    %440 = vmatprep.subr.mxu0 0.0
    %441 = vmatpush1.msra.mxu0 0.0
    %442 = vmatprep.subr.mxu0 0.0
    %443 = vmatpush1.msra.mxu0 0.0
    %444 = vmatprep.subr.mxu0 0.0
    %445 = vmatpush1.msra.mxu0 0.0
    %446 = vmatprep.subr.mxu0 0.0
    %447 = vmatpush1.msra.mxu0 0.0
    %448 = vmatprep.subr.mxu0 0.0
    %449 = vmatpush1.msra.mxu0 0.0
    %450 = vmatprep.subr.mxu0 0.0
    %451 = vmatpush1.msra.mxu0 0.0
    %452 = vmatprep.subr.mxu0 0.0
    %453 = vmatpush1.msra.mxu0 0.0
    %454 = vmatprep.subr.mxu0 0.0
    %455 = vmatpush1.msra.mxu0 0.0
    %456 = vmatprep.subr.mxu0 0.0
    %457 = vmatpush1.msra.mxu0 0.0
    %458 = vmatprep.subr.mxu0 0.0
    %459 = vmatpush1.msra.mxu0 0.0
    %460 = vmatprep.subr.mxu0 0.0
    %461 = vmatpush1.msra.mxu0 0.0
    %462 = vmatprep.subr.mxu0 0.0
    %463 = vmatpush1.msra.mxu0 0.0
    %464 = vmatprep.subr.mxu0 0.0
    %465 = vmatpush1.msra.mxu0 0.0
    %466 = vmatprep.subr.mxu0 0.0
    %467 = vmatpush1.msra.mxu0 0.0
    %468 = vmatprep.subr.mxu0 0.0
    %469 = vmatpush1.msra.mxu0 0.0
    %470 = vmatprep.subr.mxu0 0.0
    %471 = vmatpush1.msra.mxu0 0.0
    %472 = vmatprep.subr.mxu0 0.0
    %473 = vmatpush1.msra.mxu0 0.0
    %474 = vmatprep.subr.mxu0 0.0
    %475 = vmatpush1.msra.mxu0 0.0
    %476 = vmatprep.subr.mxu0 0.0
    %477 = vmatpush1.msra.mxu0 0.0
    %478 = vmatprep.subr.mxu0 0.0
    %479 = vmatpush1.msra.mxu0 0.0
    %480 = vmatprep.subr.mxu0 0.0
    %481 = vmatpush1.msra.mxu0 0.0
    %482 = vmatprep.subr.mxu0 0.0
    %483 = vmatpush1.msra.mxu0 0.0
    %484 = vmatprep.subr.mxu0 0.0
    %485 = vmatpush1.msra.mxu0 0.0
    %486 = vmatprep.subr.mxu0 0.0
    %487 = vmatpush1.msra.mxu0 0.0
    %488 = vmatprep.mubr.f32.mxu0 0.0
    %v489 = vand.u32 %v103, 4294901760
    %490 = vmatmul.mubr.f32.gmra.mrb[0].mxu0 %v489
    %v491 = vpop.f32.mrb[0].mxu0
    %v492 = vadd.f32 %v414, %v491
    %v493 = vpop.f32.mrb[0].mxu0
    %v494 = vadd.f32 %v416, %v493
    %495 = vdwg.mxu0
    %v496 = vand.u32 %v52, 4294901760
    %497 = vmatprep.subr.mxu0 %v496
    %v498 = vand.u32 %v51, 4294901760
    %499 = vmatpush1.msra.mxu0 %v498
    %500 = vmatprep.subr.mxu0 0.0
    %501 = vmatpush1.msra.mxu0 0.0
    %502 = vmatprep.subr.mxu0 0.0
    %503 = vmatpush1.msra.mxu0 0.0
    %504 = vmatprep.subr.mxu0 0.0
    %505 = vmatpush1.msra.mxu0 0.0
    %506 = vmatprep.subr.mxu0 0.0
    %507 = vmatpush1.msra.mxu0 0.0
    %508 = vmatprep.subr.mxu0 0.0
    %509 = vmatpush1.msra.mxu0 0.0
    %510 = vmatprep.subr.mxu0 0.0
    %511 = vmatpush1.msra.mxu0 0.0
    %512 = vmatprep.subr.mxu0 0.0
    %513 = vmatpush1.msra.mxu0 0.0
    %514 = vmatprep.subr.mxu0 0.0
    %515 = vmatpush1.msra.mxu0 0.0
    %516 = vmatprep.subr.mxu0 0.0
    %517 = vmatpush1.msra.mxu0 0.0
    %518 = vmatprep.subr.mxu0 0.0
    %519 = vmatpush1.msra.mxu0 0.0
    %520 = vmatprep.subr.mxu0 0.0
    %521 = vmatpush1.msra.mxu0 0.0
    %522 = vmatprep.subr.mxu0 0.0
    %523 = vmatpush1.msra.mxu0 0.0
    %524 = vmatprep.subr.mxu0 0.0
    %525 = vmatpush1.msra.mxu0 0.0
    %526 = vmatprep.subr.mxu0 0.0
    %527 = vmatpush1.msra.mxu0 0.0
    %528 = vmatprep.subr.mxu0 0.0
    %529 = vmatpush1.msra.mxu0 0.0
    %530 = vmatprep.subr.mxu0 0.0
    %531 = vmatpush1.msra.mxu0 0.0
    %532 = vmatprep.subr.mxu0 0.0
    %533 = vmatpush1.msra.mxu0 0.0
    %534 = vmatprep.subr.mxu0 0.0
    %535 = vmatpush1.msra.mxu0 0.0
    %536 = vmatprep.subr.mxu0 0.0
    %537 = vmatpush1.msra.mxu0 0.0
    %538 = vmatprep.subr.mxu0 0.0
    %539 = vmatpush1.msra.mxu0 0.0
    %540 = vmatprep.subr.mxu0 0.0
    %541 = vmatpush1.msra.mxu0 0.0
    %542 = vmatprep.subr.mxu0 0.0
    %543 = vmatpush1.msra.mxu0 0.0
    %544 = vmatprep.subr.mxu0 0.0
    %545 = vmatpush1.msra.mxu0 0.0
    %546 = vmatprep.subr.mxu0 0.0
    %547 = vmatpush1.msra.mxu0 0.0
    %548 = vmatprep.subr.mxu0 0.0
    %549 = vmatpush1.msra.mxu0 0.0
    %550 = vmatprep.subr.mxu0 0.0
    %551 = vmatpush1.msra.mxu0 0.0
    %552 = vmatprep.subr.mxu0 0.0
    %553 = vmatpush1.msra.mxu0 0.0
    %554 = vmatprep.subr.mxu0 0.0
    %555 = vmatpush1.msra.mxu0 0.0
    %556 = vmatprep.subr.mxu0 0.0
    %557 = vmatpush1.msra.mxu0 0.0
    %558 = vmatprep.subr.mxu0 0.0
    %559 = vmatpush1.msra.mxu0 0.0
    %560 = vmatprep.subr.mxu0 0.0
    %561 = vmatpush1.msra.mxu0 0.0
    %562 = vmatprep.mubr.f32.mxu0 0.0
    %v563 = vand.u32 %v103, 4294901760
    %564 = vmatmul.mubr.f32.gmra.mrb[0].mxu0 %v563
    %v565 = vpop.f32.mrb[0].mxu0
    %v566 = vadd.f32 %v492, %v565
    %v567 = vpop.f32.mrb[0].mxu0
    %v568 = vadd.f32 %v494, %v567
    %569 = vdwg.mxu0
    %v570 = vand.u32 %v54, 4294901760
    %571 = vmatprep.subr.mxu0 %v570
    %v572 = vand.u32 %v53, 4294901760
    %573 = vmatpush1.msra.mxu0 %v572
    %574 = vmatprep.subr.mxu0 0.0
    %575 = vmatpush1.msra.mxu0 0.0
    %576 = vmatprep.subr.mxu0 0.0
    %577 = vmatpush1.msra.mxu0 0.0
    %578 = vmatprep.subr.mxu0 0.0
    %579 = vmatpush1.msra.mxu0 0.0
    %580 = vmatprep.subr.mxu0 0.0
    %581 = vmatpush1.msra.mxu0 0.0
    %582 = vmatprep.subr.mxu0 0.0
    %583 = vmatpush1.msra.mxu0 0.0
    %584 = vmatprep.subr.mxu0 0.0
    %585 = vmatpush1.msra.mxu0 0.0
    %586 = vmatprep.subr.mxu0 0.0
    %587 = vmatpush1.msra.mxu0 0.0
    %588 = vmatprep.subr.mxu0 0.0
    %589 = vmatpush1.msra.mxu0 0.0
    %590 = vmatprep.subr.mxu0 0.0
    %591 = vmatpush1.msra.mxu0 0.0
    %592 = vmatprep.subr.mxu0 0.0
    %593 = vmatpush1.msra.mxu0 0.0
    %594 = vmatprep.subr.mxu0 0.0
    %595 = vmatpush1.msra.mxu0 0.0
    %596 = vmatprep.subr.mxu0 0.0
    %597 = vmatpush1.msra.mxu0 0.0
    %598 = vmatprep.subr.mxu0 0.0
    %599 = vmatpush1.msra.mxu0 0.0
    %600 = vmatprep.subr.mxu0 0.0
    %601 = vmatpush1.msra.mxu0 0.0
    %602 = vmatprep.subr.mxu0 0.0
    %603 = vmatpush1.msra.mxu0 0.0
    %604 = vmatprep.subr.mxu0 0.0
    %605 = vmatpush1.msra.mxu0 0.0
    %606 = vmatprep.subr.mxu0 0.0
    %607 = vmatpush1.msra.mxu0 0.0
    %608 = vmatprep.subr.mxu0 0.0
    %609 = vmatpush1.msra.mxu0 0.0
    %610 = vmatprep.subr.mxu0 0.0
    %611 = vmatpush1.msra.mxu0 0.0
    %612 = vmatprep.subr.mxu0 0.0
    %613 = vmatpush1.msra.mxu0 0.0
    %614 = vmatprep.subr.mxu0 0.0
    %615 = vmatpush1.msra.mxu0 0.0
    %616 = vmatprep.subr.mxu0 0.0
    %617 = vmatpush1.msra.mxu0 0.0
    %618 = vmatprep.subr.mxu0 0.0
    %619 = vmatpush1.msra.mxu0 0.0
    %620 = vmatprep.subr.mxu0 0.0
    %621 = vmatpush1.msra.mxu0 0.0
    %622 = vmatprep.subr.mxu0 0.0
    %623 = vmatpush1.msra.mxu0 0.0
    %624 = vmatprep.subr.mxu0 0.0
    %625 = vmatpush1.msra.mxu0 0.0
    %626 = vmatprep.subr.mxu0 0.0
    %627 = vmatpush1.msra.mxu0 0.0
    %628 = vmatprep.subr.mxu0 0.0
    %629 = vmatpush1.msra.mxu0 0.0
    %630 = vmatprep.subr.mxu0 0.0
    %631 = vmatpush1.msra.mxu0 0.0
    %632 = vmatprep.subr.mxu0 0.0
    %633 = vmatpush1.msra.mxu0 0.0
    %634 = vmatprep.subr.mxu0 0.0
    %635 = vmatpush1.msra.mxu0 0.0
    %636 = vmatprep.mubr.f32.mxu0 0.0
    %v637 = vand.u32 %v103, 4294901760
    %v638 = vsub.f32 %v103, %v637
    %v639 = vand.u32 %v638, 4294901760
    %v640 = vsub.f32 %v638, %v639
    %v641 = vand.u32 %v640, 4294901760
    %642 = vmatmul.mubr.f32.gmra.mrb[0].mxu0 %v641
    %v643 = vpop.f32.mrb[0].mxu0
    %v644 = vadd.f32 %v72, %v643
    %v645 = vpop.f32.mrb[0].mxu0
    %v646 = vadd.f32 %v76, %v645
    %647 = vdwg.mxu0
    %v648 = vand.u32 %v54, 4294901760
    %v649 = vsub.f32 %v54, %v648
    %v650 = vand.u32 %v649, 4294901760
    %v651 = vsub.f32 %v649, %v650
    %v652 = vand.u32 %v651, 4294901760
    %653 = vmatprep.subr.mxu0 %v652
    %v654 = vand.u32 %v53, 4294901760
    %v655 = vsub.f32 %v53, %v654
    %v656 = vand.u32 %v655, 4294901760
    %v657 = vsub.f32 %v655, %v656
    %v658 = vand.u32 %v657, 4294901760
    %659 = vmatpush1.msra.mxu0 %v658
    %660 = vmatprep.subr.mxu0 0.0
    %661 = vmatpush1.msra.mxu0 0.0
    %662 = vmatprep.subr.mxu0 0.0
    %663 = vmatpush1.msra.mxu0 0.0
    %664 = vmatprep.subr.mxu0 0.0
    %665 = vmatpush1.msra.mxu0 0.0
    %666 = vmatprep.subr.mxu0 0.0
    %667 = vmatpush1.msra.mxu0 0.0
    %668 = vmatprep.subr.mxu0 0.0
    %669 = vmatpush1.msra.mxu0 0.0
    %670 = vmatprep.subr.mxu0 0.0
    %671 = vmatpush1.msra.mxu0 0.0
    %672 = vmatprep.subr.mxu0 0.0
    %673 = vmatpush1.msra.mxu0 0.0
    %674 = vmatprep.subr.mxu0 0.0
    %675 = vmatpush1.msra.mxu0 0.0
    %676 = vmatprep.subr.mxu0 0.0
    %677 = vmatpush1.msra.mxu0 0.0
    %678 = vmatprep.subr.mxu0 0.0
    %679 = vmatpush1.msra.mxu0 0.0
    %680 = vmatprep.subr.mxu0 0.0
    %681 = vmatpush1.msra.mxu0 0.0
    %682 = vmatprep.subr.mxu0 0.0
    %683 = vmatpush1.msra.mxu0 0.0
    %684 = vmatprep.subr.mxu0 0.0
    %685 = vmatpush1.msra.mxu0 0.0
    %686 = vmatprep.subr.mxu0 0.0
    %687 = vmatpush1.msra.mxu0 0.0
    %688 = vmatprep.subr.mxu0 0.0
    %689 = vmatpush1.msra.mxu0 0.0
    %690 = vmatprep.subr.mxu0 0.0
    %691 = vmatpush1.msra.mxu0 0.0
    %692 = vmatprep.subr.mxu0 0.0
    %693 = vmatpush1.msra.mxu0 0.0
    %694 = vmatprep.subr.mxu0 0.0
    %695 = vmatpush1.msra.mxu0 0.0
    %696 = vmatprep.subr.mxu0 0.0
    %697 = vmatpush1.msra.mxu0 0.0
    %698 = vmatprep.subr.mxu0 0.0
    %699 = vmatpush1.msra.mxu0 0.0
    %700 = vmatprep.subr.mxu0 0.0
    %701 = vmatpush1.msra.mxu0 0.0
    %702 = vmatprep.subr.mxu0 0.0
    %703 = vmatpush1.msra.mxu0 0.0
    %704 = vmatprep.subr.mxu0 0.0
    %705 = vmatpush1.msra.mxu0 0.0
    %706 = vmatprep.subr.mxu0 0.0
    %707 = vmatpush1.msra.mxu0 0.0
    %708 = vmatprep.subr.mxu0 0.0
    %709 = vmatpush1.msra.mxu0 0.0
    %710 = vmatprep.subr.mxu0 0.0
    %711 = vmatpush1.msra.mxu0 0.0
    %712 = vmatprep.subr.mxu0 0.0
    %713 = vmatpush1.msra.mxu0 0.0
    %714 = vmatprep.subr.mxu0 0.0
    %715 = vmatpush1.msra.mxu0 0.0
    %716 = vmatprep.subr.mxu0 0.0
    %717 = vmatpush1.msra.mxu0 0.0
    %718 = vmatprep.subr.mxu0 0.0
    %719 = vmatpush1.msra.mxu0 0.0
    %720 = vmatprep.subr.mxu0 0.0
    %721 = vmatpush1.msra.mxu0 0.0
    %722 = vmatprep.mubr.f32.mxu0 0.0
    %v723 = vand.u32 %v103, 4294901760
    %724 = vmatmul.mubr.f32.gmra.mrb[0].mxu0 %v723
    %v725 = vpop.f32.mrb[0].mxu0
    %v726 = vadd.f32 %v644, %v725
    %v727 = vpop.f32.mrb[0].mxu0
    %v728 = vadd.f32 %v646, %v727
    %729 = vdwg.mxu0
    %v730 = vand.u32 %v54, 4294901760
    %v731 = vsub.f32 %v54, %v730
    %732 = vmatprep.subr.mxu0 %v731
    %v733 = vand.u32 %v53, 4294901760
    %v734 = vsub.f32 %v53, %v733
    %735 = vmatpush1.msra.mxu0 %v734
    %736 = vmatprep.subr.mxu0 0.0
    %737 = vmatpush1.msra.mxu0 0.0
    %738 = vmatprep.subr.mxu0 0.0
    %739 = vmatpush1.msra.mxu0 0.0
    %740 = vmatprep.subr.mxu0 0.0
    %741 = vmatpush1.msra.mxu0 0.0
    %742 = vmatprep.subr.mxu0 0.0
    %743 = vmatpush1.msra.mxu0 0.0
    %744 = vmatprep.subr.mxu0 0.0
    %745 = vmatpush1.msra.mxu0 0.0
    %746 = vmatprep.subr.mxu0 0.0
    %747 = vmatpush1.msra.mxu0 0.0
    %748 = vmatprep.subr.mxu0 0.0
    %749 = vmatpush1.msra.mxu0 0.0
    %750 = vmatprep.subr.mxu0 0.0
    %751 = vmatpush1.msra.mxu0 0.0
    %752 = vmatprep.subr.mxu0 0.0
    %753 = vmatpush1.msra.mxu0 0.0
    %754 = vmatprep.subr.mxu0 0.0
    %755 = vmatpush1.msra.mxu0 0.0
    %756 = vmatprep.subr.mxu0 0.0
    %757 = vmatpush1.msra.mxu0 0.0
    %758 = vmatprep.subr.mxu0 0.0
    %759 = vmatpush1.msra.mxu0 0.0
    %760 = vmatprep.subr.mxu0 0.0
    %761 = vmatpush1.msra.mxu0 0.0
    %762 = vmatprep.subr.mxu0 0.0
    %763 = vmatpush1.msra.mxu0 0.0
    %764 = vmatprep.subr.mxu0 0.0
    %765 = vmatpush1.msra.mxu0 0.0
    %766 = vmatprep.subr.mxu0 0.0
    %767 = vmatpush1.msra.mxu0 0.0
    %768 = vmatprep.subr.mxu0 0.0
    %769 = vmatpush1.msra.mxu0 0.0
    %770 = vmatprep.subr.mxu0 0.0
    %771 = vmatpush1.msra.mxu0 0.0
    %772 = vmatprep.subr.mxu0 0.0
    %773 = vmatpush1.msra.mxu0 0.0
    %774 = vmatprep.subr.mxu0 0.0
    %775 = vmatpush1.msra.mxu0 0.0
    %776 = vmatprep.subr.mxu0 0.0
    %777 = vmatpush1.msra.mxu0 0.0
    %778 = vmatprep.subr.mxu0 0.0
    %779 = vmatpush1.msra.mxu0 0.0
    %780 = vmatprep.subr.mxu0 0.0
    %781 = vmatpush1.msra.mxu0 0.0
    %782 = vmatprep.subr.mxu0 0.0
    %783 = vmatpush1.msra.mxu0 0.0
    %784 = vmatprep.subr.mxu0 0.0
    %785 = vmatpush1.msra.mxu0 0.0
    %786 = vmatprep.subr.mxu0 0.0
    %787 = vmatpush1.msra.mxu0 0.0
    %788 = vmatprep.subr.mxu0 0.0
    %789 = vmatpush1.msra.mxu0 0.0
    %790 = vmatprep.subr.mxu0 0.0
    %791 = vmatpush1.msra.mxu0 0.0
    %792 = vmatprep.subr.mxu0 0.0
    %793 = vmatpush1.msra.mxu0 0.0
    %794 = vmatprep.subr.mxu0 0.0
    %795 = vmatpush1.msra.mxu0 0.0
    %796 = vmatprep.subr.mxu0 0.0
    %797 = vmatpush1.msra.mxu0 0.0
    %798 = vmatprep.mubr.f32.mxu0 0.0
    %v799 = vand.u32 %v103, 4294901760
    %v800 = vsub.f32 %v103, %v799
    %801 = vmatmul.mubr.f32.gmra.mrb[0].mxu0 %v800
    %v802 = vpop.f32.mrb[0].mxu0
    %v803 = vadd.f32 %v726, %v802
    %v804 = vpop.f32.mrb[0].mxu0
    %v805 = vadd.f32 %v728, %v804
    %806 = vdwg.mxu0
    %v807 = vand.u32 %v54, 4294901760
    %808 = vmatprep.subr.mxu0 %v807
    %v809 = vand.u32 %v53, 4294901760
    %810 = vmatpush1.msra.mxu0 %v809
    %811 = vmatprep.subr.mxu0 0.0
    %812 = vmatpush1.msra.mxu0 0.0
    %813 = vmatprep.subr.mxu0 0.0
    %814 = vmatpush1.msra.mxu0 0.0
    %815 = vmatprep.subr.mxu0 0.0
    %816 = vmatpush1.msra.mxu0 0.0
    %817 = vmatprep.subr.mxu0 0.0
    %818 = vmatpush1.msra.mxu0 0.0
    %819 = vmatprep.subr.mxu0 0.0
    %820 = vmatpush1.msra.mxu0 0.0
    %821 = vmatprep.subr.mxu0 0.0
    %822 = vmatpush1.msra.mxu0 0.0
    %823 = vmatprep.subr.mxu0 0.0
    %824 = vmatpush1.msra.mxu0 0.0
    %825 = vmatprep.subr.mxu0 0.0
    %826 = vmatpush1.msra.mxu0 0.0
    %827 = vmatprep.subr.mxu0 0.0
    %828 = vmatpush1.msra.mxu0 0.0
    %829 = vmatprep.subr.mxu0 0.0
    %830 = vmatpush1.msra.mxu0 0.0
    %831 = vmatprep.subr.mxu0 0.0
    %832 = vmatpush1.msra.mxu0 0.0
    %833 = vmatprep.subr.mxu0 0.0
    %834 = vmatpush1.msra.mxu0 0.0
    %835 = vmatprep.subr.mxu0 0.0
    %836 = vmatpush1.msra.mxu0 0.0
    %837 = vmatprep.subr.mxu0 0.0
    %838 = vmatpush1.msra.mxu0 0.0
    %839 = vmatprep.subr.mxu0 0.0
    %840 = vmatpush1.msra.mxu0 0.0
    %841 = vmatprep.subr.mxu0 0.0
    %842 = vmatpush1.msra.mxu0 0.0
    %843 = vmatprep.subr.mxu0 0.0
    %844 = vmatpush1.msra.mxu0 0.0
    %845 = vmatprep.subr.mxu0 0.0
    %846 = vmatpush1.msra.mxu0 0.0
    %847 = vmatprep.subr.mxu0 0.0
    %848 = vmatpush1.msra.mxu0 0.0
    %849 = vmatprep.subr.mxu0 0.0
    %850 = vmatpush1.msra.mxu0 0.0
    %851 = vmatprep.subr.mxu0 0.0
    %852 = vmatpush1.msra.mxu0 0.0
    %853 = vmatprep.subr.mxu0 0.0
    %854 = vmatpush1.msra.mxu0 0.0
    %855 = vmatprep.subr.mxu0 0.0
    %856 = vmatpush1.msra.mxu0 0.0
    %857 = vmatprep.subr.mxu0 0.0
    %858 = vmatpush1.msra.mxu0 0.0
    %859 = vmatprep.subr.mxu0 0.0
    %860 = vmatpush1.msra.mxu0 0.0
    %861 = vmatprep.subr.mxu0 0.0
    %862 = vmatpush1.msra.mxu0 0.0
    %863 = vmatprep.subr.mxu0 0.0
    %864 = vmatpush1.msra.mxu0 0.0
    %865 = vmatprep.subr.mxu0 0.0
    %866 = vmatpush1.msra.mxu0 0.0
    %867 = vmatprep.subr.mxu0 0.0
    %868 = vmatpush1.msra.mxu0 0.0
    %869 = vmatprep.subr.mxu0 0.0
    %870 = vmatpush1.msra.mxu0 0.0
    %871 = vmatprep.subr.mxu0 0.0
    %872 = vmatpush1.msra.mxu0 0.0
    %873 = vmatprep.mubr.f32.mxu0 0.0
    %v874 = vand.u32 %v103, 4294901760
    %v875 = vsub.f32 %v103, %v874
    %v876 = vand.u32 %v875, 4294901760
    %877 = vmatmul.mubr.f32.gmra.mrb[0].mxu0 %v876
    %v878 = vpop.f32.mrb[0].mxu0
    %v879 = vadd.f32 %v803, %v878
    %v880 = vpop.f32.mrb[0].mxu0
    %v881 = vadd.f32 %v805, %v880
    %882 = vdwg.mxu0
    %v883 = vand.u32 %v54, 4294901760
    %v884 = vsub.f32 %v54, %v883
    %v885 = vand.u32 %v884, 4294901760
    %886 = vmatprep.subr.mxu0 %v885
    %v887 = vand.u32 %v53, 4294901760
    %v888 = vsub.f32 %v53, %v887
    %v889 = vand.u32 %v888, 4294901760
    %890 = vmatpush1.msra.mxu0 %v889
    %891 = vmatprep.subr.mxu0 0.0
    %892 = vmatpush1.msra.mxu0 0.0
    %893 = vmatprep.subr.mxu0 0.0
    %894 = vmatpush1.msra.mxu0 0.0
    %895 = vmatprep.subr.mxu0 0.0
    %896 = vmatpush1.msra.mxu0 0.0
    %897 = vmatprep.subr.mxu0 0.0
    %898 = vmatpush1.msra.mxu0 0.0
    %899 = vmatprep.subr.mxu0 0.0
    %900 = vmatpush1.msra.mxu0 0.0
    %901 = vmatprep.subr.mxu0 0.0
    %902 = vmatpush1.msra.mxu0 0.0
    %903 = vmatprep.subr.mxu0 0.0
    %904 = vmatpush1.msra.mxu0 0.0
    %905 = vmatprep.subr.mxu0 0.0
    %906 = vmatpush1.msra.mxu0 0.0
    %907 = vmatprep.subr.mxu0 0.0
    %908 = vmatpush1.msra.mxu0 0.0
    %909 = vmatprep.subr.mxu0 0.0
    %910 = vmatpush1.msra.mxu0 0.0
    %911 = vmatprep.subr.mxu0 0.0
    %912 = vmatpush1.msra.mxu0 0.0
    %913 = vmatprep.subr.mxu0 0.0
    %914 = vmatpush1.msra.mxu0 0.0
    %915 = vmatprep.subr.mxu0 0.0
    %916 = vmatpush1.msra.mxu0 0.0
    %917 = vmatprep.subr.mxu0 0.0
    %918 = vmatpush1.msra.mxu0 0.0
    %919 = vmatprep.subr.mxu0 0.0
    %920 = vmatpush1.msra.mxu0 0.0
    %921 = vmatprep.subr.mxu0 0.0
    %922 = vmatpush1.msra.mxu0 0.0
    %923 = vmatprep.subr.mxu0 0.0
    %924 = vmatpush1.msra.mxu0 0.0
    %925 = vmatprep.subr.mxu0 0.0
    %926 = vmatpush1.msra.mxu0 0.0
    %927 = vmatprep.subr.mxu0 0.0
    %928 = vmatpush1.msra.mxu0 0.0
    %929 = vmatprep.subr.mxu0 0.0
    %930 = vmatpush1.msra.mxu0 0.0
    %931 = vmatprep.subr.mxu0 0.0
    %932 = vmatpush1.msra.mxu0 0.0
    %933 = vmatprep.subr.mxu0 0.0
    %934 = vmatpush1.msra.mxu0 0.0
    %935 = vmatprep.subr.mxu0 0.0
    %936 = vmatpush1.msra.mxu0 0.0
    %937 = vmatprep.subr.mxu0 0.0
    %938 = vmatpush1.msra.mxu0 0.0
    %939 = vmatprep.subr.mxu0 0.0
    %940 = vmatpush1.msra.mxu0 0.0
    %941 = vmatprep.subr.mxu0 0.0
    %942 = vmatpush1.msra.mxu0 0.0
    %943 = vmatprep.subr.mxu0 0.0
    %944 = vmatpush1.msra.mxu0 0.0
    %945 = vmatprep.subr.mxu0 0.0
    %946 = vmatpush1.msra.mxu0 0.0
    %947 = vmatprep.subr.mxu0 0.0
    %948 = vmatpush1.msra.mxu0 0.0
    %949 = vmatprep.subr.mxu0 0.0
    %950 = vmatpush1.msra.mxu0 0.0
    %951 = vmatprep.subr.mxu0 0.0
    %952 = vmatpush1.msra.mxu0 0.0
    %953 = vmatprep.mubr.f32.mxu0 0.0
    %v954 = vand.u32 %v103, 4294901760
    %955 = vmatmul.mubr.f32.gmra.mrb[0].mxu0 %v954
    %v956 = vpop.f32.mrb[0].mxu0
    %v957 = vadd.f32 %v879, %v956
    %v958 = vpop.f32.mrb[0].mxu0
    %v959 = vadd.f32 %v881, %v958
    %960 = vdwg.mxu0
    %v961 = vand.u32 %v54, 4294901760
    %962 = vmatprep.subr.mxu0 %v961
    %v963 = vand.u32 %v53, 4294901760
    %964 = vmatpush1.msra.mxu0 %v963
    %965 = vmatprep.subr.mxu0 0.0
    %966 = vmatpush1.msra.mxu0 0.0
    %967 = vmatprep.subr.mxu0 0.0
    %968 = vmatpush1.msra.mxu0 0.0
    %969 = vmatprep.subr.mxu0 0.0
    %970 = vmatpush1.msra.mxu0 0.0
    %971 = vmatprep.subr.mxu0 0.0
    %972 = vmatpush1.msra.mxu0 0.0
    %973 = vmatprep.subr.mxu0 0.0
    %974 = vmatpush1.msra.mxu0 0.0
    %975 = vmatprep.subr.mxu0 0.0
    %976 = vmatpush1.msra.mxu0 0.0
    %977 = vmatprep.subr.mxu0 0.0
    %978 = vmatpush1.msra.mxu0 0.0
    %979 = vmatprep.subr.mxu0 0.0
    %980 = vmatpush1.msra.mxu0 0.0
    %981 = vmatprep.subr.mxu0 0.0
    %982 = vmatpush1.msra.mxu0 0.0
    %983 = vmatprep.subr.mxu0 0.0
    %984 = vmatpush1.msra.mxu0 0.0
    %985 = vmatprep.subr.mxu0 0.0
    %986 = vmatpush1.msra.mxu0 0.0
    %987 = vmatprep.subr.mxu0 0.0
    %988 = vmatpush1.msra.mxu0 0.0
    %989 = vmatprep.subr.mxu0 0.0
    %990 = vmatpush1.msra.mxu0 0.0
    %991 = vmatprep.subr.mxu0 0.0
    %992 = vmatpush1.msra.mxu0 0.0
    %993 = vmatprep.subr.mxu0 0.0
    %994 = vmatpush1.msra.mxu0 0.0
    %995 = vmatprep.subr.mxu0 0.0
    %996 = vmatpush1.msra.mxu0 0.0
    %997 = vmatprep.subr.mxu0 0.0
    %998 = vmatpush1.msra.mxu0 0.0
    %999 = vmatprep.subr.mxu0 0.0
    %1000 = vmatpush1.msra.mxu0 0.0
    %1001 = vmatprep.subr.mxu0 0.0
    %1002 = vmatpush1.msra.mxu0 0.0
    %1003 = vmatprep.subr.mxu0 0.0
    %1004 = vmatpush1.msra.mxu0 0.0
    %1005 = vmatprep.subr.mxu0 0.0
    %1006 = vmatpush1.msra.mxu0 0.0
    %1007 = vmatprep.subr.mxu0 0.0
    %1008 = vmatpush1.msra.mxu0 0.0
    %1009 = vmatprep.subr.mxu0 0.0
    %1010 = vmatpush1.msra.mxu0 0.0
    %1011 = vmatprep.subr.mxu0 0.0
    %1012 = vmatpush1.msra.mxu0 0.0
    %1013 = vmatprep.subr.mxu0 0.0
    %1014 = vmatpush1.msra.mxu0 0.0
    %1015 = vmatprep.subr.mxu0 0.0
    %1016 = vmatpush1.msra.mxu0 0.0
    %1017 = vmatprep.subr.mxu0 0.0
    %1018 = vmatpush1.msra.mxu0 0.0
    %1019 = vmatprep.subr.mxu0 0.0
    %1020 = vmatpush1.msra.mxu0 0.0
    %1021 = vmatprep.subr.mxu0 0.0
    %1022 = vmatpush1.msra.mxu0 0.0
    %1023 = vmatprep.subr.mxu0 0.0
    %1024 = vmatpush1.msra.mxu0 0.0
    %1025 = vmatprep.subr.mxu0 0.0
    %1026 = vmatpush1.msra.mxu0 0.0
    %1027 = vmatprep.mubr.f32.mxu0 0.0
    %v1028 = vand.u32 %v103, 4294901760
    %1029 = vmatmul.mubr.f32.gmra.mrb[0].mxu0 %v1028
    %v1030 = vpop.f32.mrb[0].mxu0
    %v1031 = vadd.f32 %v957, %v1030
    %v1032 = vpop.f32.mrb[0].mxu0
    %v1033 = vadd.f32 %v959, %v1032
    %1034 = vdwg.mxu0
    %v1035 = vand.u32 %v56, 4294901760
    %1036 = vmatprep.subr.mxu0 %v1035
    %v1037 = vand.u32 %v55, 4294901760
    %1038 = vmatpush1.msra.mxu0 %v1037
    %1039 = vmatprep.subr.mxu0 0.0
    %1040 = vmatpush1.msra.mxu0 0.0
    %1041 = vmatprep.subr.mxu0 0.0
    %1042 = vmatpush1.msra.mxu0 0.0
    %1043 = vmatprep.subr.mxu0 0.0
    %1044 = vmatpush1.msra.mxu0 0.0
    %1045 = vmatprep.subr.mxu0 0.0
    %1046 = vmatpush1.msra.mxu0 0.0
    %1047 = vmatprep.subr.mxu0 0.0
    %1048 = vmatpush1.msra.mxu0 0.0
    %1049 = vmatprep.subr.mxu0 0.0
    %1050 = vmatpush1.msra.mxu0 0.0
    %1051 = vmatprep.subr.mxu0 0.0
    %1052 = vmatpush1.msra.mxu0 0.0
    %1053 = vmatprep.subr.mxu0 0.0
    %1054 = vmatpush1.msra.mxu0 0.0
    %1055 = vmatprep.subr.mxu0 0.0
    %1056 = vmatpush1.msra.mxu0 0.0
    %1057 = vmatprep.subr.mxu0 0.0
    %1058 = vmatpush1.msra.mxu0 0.0
    %1059 = vmatprep.subr.mxu0 0.0
    %1060 = vmatpush1.msra.mxu0 0.0
    %1061 = vmatprep.subr.mxu0 0.0
    %1062 = vmatpush1.msra.mxu0 0.0
    %1063 = vmatprep.subr.mxu0 0.0
    %1064 = vmatpush1.msra.mxu0 0.0
    %1065 = vmatprep.subr.mxu0 0.0
    %1066 = vmatpush1.msra.mxu0 0.0
    %1067 = vmatprep.subr.mxu0 0.0
    %1068 = vmatpush1.msra.mxu0 0.0
    %1069 = vmatprep.subr.mxu0 0.0
    %1070 = vmatpush1.msra.mxu0 0.0
    %1071 = vmatprep.subr.mxu0 0.0
    %1072 = vmatpush1.msra.mxu0 0.0
    %1073 = vmatprep.subr.mxu0 0.0
    %1074 = vmatpush1.msra.mxu0 0.0
    %1075 = vmatprep.subr.mxu0 0.0
    %1076 = vmatpush1.msra.mxu0 0.0
    %1077 = vmatprep.subr.mxu0 0.0
    %1078 = vmatpush1.msra.mxu0 0.0
    %1079 = vmatprep.subr.mxu0 0.0
    %1080 = vmatpush1.msra.mxu0 0.0
    %1081 = vmatprep.subr.mxu0 0.0
    %1082 = vmatpush1.msra.mxu0 0.0
    %1083 = vmatprep.subr.mxu0 0.0
    %1084 = vmatpush1.msra.mxu0 0.0
    %1085 = vmatprep.subr.mxu0 0.0
    %1086 = vmatpush1.msra.mxu0 0.0
    %1087 = vmatprep.subr.mxu0 0.0
    %1088 = vmatpush1.msra.mxu0 0.0
    %1089 = vmatprep.subr.mxu0 0.0
    %1090 = vmatpush1.msra.mxu0 0.0
    %1091 = vmatprep.subr.mxu0 0.0
    %1092 = vmatpush1.msra.mxu0 0.0
    %1093 = vmatprep.subr.mxu0 0.0
    %1094 = vmatpush1.msra.mxu0 0.0
    %1095 = vmatprep.subr.mxu0 0.0
    %1096 = vmatpush1.msra.mxu0 0.0
    %1097 = vmatprep.subr.mxu0 0.0
    %1098 = vmatpush1.msra.mxu0 0.0
    %1099 = vmatprep.subr.mxu0 0.0
    %1100 = vmatpush1.msra.mxu0 0.0
    %1101 = vmatprep.mubr.f32.mxu0 0.0
    %v1102 = vand.u32 %v103, 4294901760
    %v1103 = vsub.f32 %v103, %v1102
    %v1104 = vand.u32 %v1103, 4294901760
    %v1105 = vsub.f32 %v1103, %v1104
    %v1106 = vand.u32 %v1105, 4294901760
    %1107 = vmatmul.mubr.f32.gmra.mrb[0].mxu0 %v1106
    %v1108 = vpop.f32.mrb[0].mxu0
    %v1109 = vadd.f32 %v80, %v1108
    %v1110 = vpop.f32.mrb[0].mxu0
    %v1111 = vadd.f32 %v84, %v1110
    %1112 = vdwg.mxu0
    %v1113 = vand.u32 %v56, 4294901760
    %v1114 = vsub.f32 %v56, %v1113
    %v1115 = vand.u32 %v1114, 4294901760
    %v1116 = vsub.f32 %v1114, %v1115
    %v1117 = vand.u32 %v1116, 4294901760
    %1118 = vmatprep.subr.mxu0 %v1117
    %v1119 = vand.u32 %v55, 4294901760
    %v1120 = vsub.f32 %v55, %v1119
    %v1121 = vand.u32 %v1120, 4294901760
    %v1122 = vsub.f32 %v1120, %v1121
    %v1123 = vand.u32 %v1122, 4294901760
    %1124 = vmatpush1.msra.mxu0 %v1123
    %1125 = vmatprep.subr.mxu0 0.0
    %1126 = vmatpush1.msra.mxu0 0.0
    %1127 = vmatprep.subr.mxu0 0.0
    %1128 = vmatpush1.msra.mxu0 0.0
    %1129 = vmatprep.subr.mxu0 0.0
    %1130 = vmatpush1.msra.mxu0 0.0
    %1131 = vmatprep.subr.mxu0 0.0
    %1132 = vmatpush1.msra.mxu0 0.0
    %1133 = vmatprep.subr.mxu0 0.0
    %1134 = vmatpush1.msra.mxu0 0.0
    %1135 = vmatprep.subr.mxu0 0.0
    %1136 = vmatpush1.msra.mxu0 0.0
    %1137 = vmatprep.subr.mxu0 0.0
    %1138 = vmatpush1.msra.mxu0 0.0
    %1139 = vmatprep.subr.mxu0 0.0
    %1140 = vmatpush1.msra.mxu0 0.0
    %1141 = vmatprep.subr.mxu0 0.0
    %1142 = vmatpush1.msra.mxu0 0.0
    %1143 = vmatprep.subr.mxu0 0.0
    %1144 = vmatpush1.msra.mxu0 0.0
    %1145 = vmatprep.subr.mxu0 0.0
    %1146 = vmatpush1.msra.mxu0 0.0
    %1147 = vmatprep.subr.mxu0 0.0
    %1148 = vmatpush1.msra.mxu0 0.0
    %1149 = vmatprep.subr.mxu0 0.0
    %1150 = vmatpush1.msra.mxu0 0.0
    %1151 = vmatprep.subr.mxu0 0.0
    %1152 = vmatpush1.msra.mxu0 0.0
    %1153 = vmatprep.subr.mxu0 0.0
    %1154 = vmatpush1.msra.mxu0 0.0
    %1155 = vmatprep.subr.mxu0 0.0
    %1156 = vmatpush1.msra.mxu0 0.0
    %1157 = vmatprep.subr.mxu0 0.0
    %1158 = vmatpush1.msra.mxu0 0.0
    %1159 = vmatprep.subr.mxu0 0.0
    %1160 = vmatpush1.msra.mxu0 0.0
    %1161 = vmatprep.subr.mxu0 0.0
    %1162 = vmatpush1.msra.mxu0 0.0
    %1163 = vmatprep.subr.mxu0 0.0
    %1164 = vmatpush1.msra.mxu0 0.0
    %1165 = vmatprep.subr.mxu0 0.0
    %1166 = vmatpush1.msra.mxu0 0.0
    %1167 = vmatprep.subr.mxu0 0.0
    %1168 = vmatpush1.msra.mxu0 0.0
    %1169 = vmatprep.subr.mxu0 0.0
    %1170 = vmatpush1.msra.mxu0 0.0
    %1171 = vmatprep.subr.mxu0 0.0
    %1172 = vmatpush1.msra.mxu0 0.0
    %1173 = vmatprep.subr.mxu0 0.0
    %1174 = vmatpush1.msra.mxu0 0.0
    %1175 = vmatprep.subr.mxu0 0.0
    %1176 = vmatpush1.msra.mxu0 0.0
    %1177 = vmatprep.subr.mxu0 0.0
    %1178 = vmatpush1.msra.mxu0 0.0
    %1179 = vmatprep.subr.mxu0 0.0
    %1180 = vmatpush1.msra.mxu0 0.0
    %1181 = vmatprep.subr.mxu0 0.0
    %1182 = vmatpush1.msra.mxu0 0.0
    %1183 = vmatprep.subr.mxu0 0.0
    %1184 = vmatpush1.msra.mxu0 0.0
    %1185 = vmatprep.subr.mxu0 0.0
    %1186 = vmatpush1.msra.mxu0 0.0
    %1187 = vmatprep.mubr.f32.mxu0 0.0
    %v1188 = vand.u32 %v103, 4294901760
    %1189 = vmatmul.mubr.f32.gmra.mrb[0].mxu0 %v1188
    %v1190 = vpop.f32.mrb[0].mxu0
    %v1191 = vadd.f32 %v1109, %v1190
    %v1192 = vpop.f32.mrb[0].mxu0
    %v1193 = vadd.f32 %v1111, %v1192
    %1194 = vdwg.mxu0
    %v1195 = vand.u32 %v56, 4294901760
    %v1196 = vsub.f32 %v56, %v1195
    %1197 = vmatprep.subr.mxu0 %v1196
    %v1198 = vand.u32 %v55, 4294901760
    %v1199 = vsub.f32 %v55, %v1198
    %1200 = vmatpush1.msra.mxu0 %v1199
    %1201 = vmatprep.subr.mxu0 0.0
    %1202 = vmatpush1.msra.mxu0 0.0
    %1203 = vmatprep.subr.mxu0 0.0
    %1204 = vmatpush1.msra.mxu0 0.0
    %1205 = vmatprep.subr.mxu0 0.0
    %1206 = vmatpush1.msra.mxu0 0.0
    %1207 = vmatprep.subr.mxu0 0.0
    %1208 = vmatpush1.msra.mxu0 0.0
    %1209 = vmatprep.subr.mxu0 0.0
    %1210 = vmatpush1.msra.mxu0 0.0
    %1211 = vmatprep.subr.mxu0 0.0
    %1212 = vmatpush1.msra.mxu0 0.0
    %1213 = vmatprep.subr.mxu0 0.0
    %1214 = vmatpush1.msra.mxu0 0.0
    %1215 = vmatprep.subr.mxu0 0.0
    %1216 = vmatpush1.msra.mxu0 0.0
    %1217 = vmatprep.subr.mxu0 0.0
    %1218 = vmatpush1.msra.mxu0 0.0
    %1219 = vmatprep.subr.mxu0 0.0
    %1220 = vmatpush1.msra.mxu0 0.0
    %1221 = vmatprep.subr.mxu0 0.0
    %1222 = vmatpush1.msra.mxu0 0.0
    %1223 = vmatprep.subr.mxu0 0.0
    %1224 = vmatpush1.msra.mxu0 0.0
    %1225 = vmatprep.subr.mxu0 0.0
    %1226 = vmatpush1.msra.mxu0 0.0
    %1227 = vmatprep.subr.mxu0 0.0
    %1228 = vmatpush1.msra.mxu0 0.0
    %1229 = vmatprep.subr.mxu0 0.0
    %1230 = vmatpush1.msra.mxu0 0.0
    %1231 = vmatprep.subr.mxu0 0.0
    %1232 = vmatpush1.msra.mxu0 0.0
    %1233 = vmatprep.subr.mxu0 0.0
    %1234 = vmatpush1.msra.mxu0 0.0
    %1235 = vmatprep.subr.mxu0 0.0
    %1236 = vmatpush1.msra.mxu0 0.0
    %1237 = vmatprep.subr.mxu0 0.0
    %1238 = vmatpush1.msra.mxu0 0.0
    %1239 = vmatprep.subr.mxu0 0.0
    %1240 = vmatpush1.msra.mxu0 0.0
    %1241 = vmatprep.subr.mxu0 0.0
    %1242 = vmatpush1.msra.mxu0 0.0
    %1243 = vmatprep.subr.mxu0 0.0
    %1244 = vmatpush1.msra.mxu0 0.0
    %1245 = vmatprep.subr.mxu0 0.0
    %1246 = vmatpush1.msra.mxu0 0.0
    %1247 = vmatprep.subr.mxu0 0.0
    %1248 = vmatpush1.msra.mxu0 0.0
    %1249 = vmatprep.subr.mxu0 0.0
    %1250 = vmatpush1.msra.mxu0 0.0
    %1251 = vmatprep.subr.mxu0 0.0
    %1252 = vmatpush1.msra.mxu0 0.0
    %1253 = vmatprep.subr.mxu0 0.0
    %1254 = vmatpush1.msra.mxu0 0.0
    %1255 = vmatprep.subr.mxu0 0.0
    %1256 = vmatpush1.msra.mxu0 0.0
    %1257 = vmatprep.subr.mxu0 0.0
    %1258 = vmatpush1.msra.mxu0 0.0
    %1259 = vmatprep.subr.mxu0 0.0
    %1260 = vmatpush1.msra.mxu0 0.0
    %1261 = vmatprep.subr.mxu0 0.0
    %1262 = vmatpush1.msra.mxu0 0.0
    %1263 = vmatprep.mubr.f32.mxu0 0.0
    %v1264 = vand.u32 %v103, 4294901760
    %v1265 = vsub.f32 %v103, %v1264
    %1266 = vmatmul.mubr.f32.gmra.mrb[0].mxu0 %v1265
    %v1267 = vpop.f32.mrb[0].mxu0
    %v1268 = vadd.f32 %v1191, %v1267
    %v1269 = vpop.f32.mrb[0].mxu0
    %v1270 = vadd.f32 %v1193, %v1269
    %1271 = vdwg.mxu0
    %v1272 = vand.u32 %v56, 4294901760
    %1273 = vmatprep.subr.mxu0 %v1272
    %v1274 = vand.u32 %v55, 4294901760
    %1275 = vmatpush1.msra.mxu0 %v1274
    %1276 = vmatprep.subr.mxu0 0.0
    %1277 = vmatpush1.msra.mxu0 0.0
    %1278 = vmatprep.subr.mxu0 0.0
    %1279 = vmatpush1.msra.mxu0 0.0
    %1280 = vmatprep.subr.mxu0 0.0
    %1281 = vmatpush1.msra.mxu0 0.0
    %1282 = vmatprep.subr.mxu0 0.0
    %1283 = vmatpush1.msra.mxu0 0.0
    %1284 = vmatprep.subr.mxu0 0.0
    %1285 = vmatpush1.msra.mxu0 0.0
    %1286 = vmatprep.subr.mxu0 0.0
    %1287 = vmatpush1.msra.mxu0 0.0
    %1288 = vmatprep.subr.mxu0 0.0
    %1289 = vmatpush1.msra.mxu0 0.0
    %1290 = vmatprep.subr.mxu0 0.0
    %1291 = vmatpush1.msra.mxu0 0.0
    %1292 = vmatprep.subr.mxu0 0.0
    %1293 = vmatpush1.msra.mxu0 0.0
    %1294 = vmatprep.subr.mxu0 0.0
    %1295 = vmatpush1.msra.mxu0 0.0
    %1296 = vmatprep.subr.mxu0 0.0
    %1297 = vmatpush1.msra.mxu0 0.0
    %1298 = vmatprep.subr.mxu0 0.0
    %1299 = vmatpush1.msra.mxu0 0.0
    %1300 = vmatprep.subr.mxu0 0.0
    %1301 = vmatpush1.msra.mxu0 0.0
    %1302 = vmatprep.subr.mxu0 0.0
    %1303 = vmatpush1.msra.mxu0 0.0
    %1304 = vmatprep.subr.mxu0 0.0
    %1305 = vmatpush1.msra.mxu0 0.0
    %1306 = vmatprep.subr.mxu0 0.0
    %1307 = vmatpush1.msra.mxu0 0.0
    %1308 = vmatprep.subr.mxu0 0.0
    %1309 = vmatpush1.msra.mxu0 0.0
    %1310 = vmatprep.subr.mxu0 0.0
    %1311 = vmatpush1.msra.mxu0 0.0
    %1312 = vmatprep.subr.mxu0 0.0
    %1313 = vmatpush1.msra.mxu0 0.0
    %1314 = vmatprep.subr.mxu0 0.0
    %1315 = vmatpush1.msra.mxu0 0.0
    %1316 = vmatprep.subr.mxu0 0.0
    %1317 = vmatpush1.msra.mxu0 0.0
    %1318 = vmatprep.subr.mxu0 0.0
    %1319 = vmatpush1.msra.mxu0 0.0
    %1320 = vmatprep.subr.mxu0 0.0
    %1321 = vmatpush1.msra.mxu0 0.0
    %1322 = vmatprep.subr.mxu0 0.0
    %1323 = vmatpush1.msra.mxu0 0.0
    %1324 = vmatprep.subr.mxu0 0.0
    %1325 = vmatpush1.msra.mxu0 0.0
    %1326 = vmatprep.subr.mxu0 0.0
    %1327 = vmatpush1.msra.mxu0 0.0
    %1328 = vmatprep.subr.mxu0 0.0
    %1329 = vmatpush1.msra.mxu0 0.0
    %1330 = vmatprep.subr.mxu0 0.0
    %1331 = vmatpush1.msra.mxu0 0.0
    %1332 = vmatprep.subr.mxu0 0.0
    %1333 = vmatpush1.msra.mxu0 0.0
    %1334 = vmatprep.subr.mxu0 0.0
    %1335 = vmatpush1.msra.mxu0 0.0
    %1336 = vmatprep.subr.mxu0 0.0
    %1337 = vmatpush1.msra.mxu0 0.0
    %1338 = vmatprep.mubr.f32.mxu0 0.0
    %v1339 = vand.u32 %v103, 4294901760
    %v1340 = vsub.f32 %v103, %v1339
    %v1341 = vand.u32 %v1340, 4294901760
    %1342 = vmatmul.mubr.f32.gmra.mrb[0].mxu0 %v1341
    %v1343 = vpop.f32.mrb[0].mxu0
    %v1344 = vadd.f32 %v1268, %v1343
    %v1345 = vpop.f32.mrb[0].mxu0
    %v1346 = vadd.f32 %v1270, %v1345
    %1347 = vdwg.mxu0
    %v1348 = vand.u32 %v56, 4294901760
    %v1349 = vsub.f32 %v56, %v1348
    %v1350 = vand.u32 %v1349, 4294901760
    %1351 = vmatprep.subr.mxu0 %v1350
    %v1352 = vand.u32 %v55, 4294901760
    %v1353 = vsub.f32 %v55, %v1352
    %v1354 = vand.u32 %v1353, 4294901760
    %1355 = vmatpush1.msra.mxu0 %v1354
    %1356 = vmatprep.subr.mxu0 0.0
    %1357 = vmatpush1.msra.mxu0 0.0
    %1358 = vmatprep.subr.mxu0 0.0
    %1359 = vmatpush1.msra.mxu0 0.0
    %1360 = vmatprep.subr.mxu0 0.0
    %1361 = vmatpush1.msra.mxu0 0.0
    %1362 = vmatprep.subr.mxu0 0.0
    %1363 = vmatpush1.msra.mxu0 0.0
    %1364 = vmatprep.subr.mxu0 0.0
    %1365 = vmatpush1.msra.mxu0 0.0
    %1366 = vmatprep.subr.mxu0 0.0
    %1367 = vmatpush1.msra.mxu0 0.0
    %1368 = vmatprep.subr.mxu0 0.0
    %1369 = vmatpush1.msra.mxu0 0.0
    %1370 = vmatprep.subr.mxu0 0.0
    %1371 = vmatpush1.msra.mxu0 0.0
    %1372 = vmatprep.subr.mxu0 0.0
    %1373 = vmatpush1.msra.mxu0 0.0
    %1374 = vmatprep.subr.mxu0 0.0
    %1375 = vmatpush1.msra.mxu0 0.0
    %1376 = vmatprep.subr.mxu0 0.0
    %1377 = vmatpush1.msra.mxu0 0.0
    %1378 = vmatprep.subr.mxu0 0.0
    %1379 = vmatpush1.msra.mxu0 0.0
    %1380 = vmatprep.subr.mxu0 0.0
    %1381 = vmatpush1.msra.mxu0 0.0
    %1382 = vmatprep.subr.mxu0 0.0
    %1383 = vmatpush1.msra.mxu0 0.0
    %1384 = vmatprep.subr.mxu0 0.0
    %1385 = vmatpush1.msra.mxu0 0.0
    %1386 = vmatprep.subr.mxu0 0.0
    %1387 = vmatpush1.msra.mxu0 0.0
    %1388 = vmatprep.subr.mxu0 0.0
    %1389 = vmatpush1.msra.mxu0 0.0
    %1390 = vmatprep.subr.mxu0 0.0
    %1391 = vmatpush1.msra.mxu0 0.0
    %1392 = vmatprep.subr.mxu0 0.0
    %1393 = vmatpush1.msra.mxu0 0.0
    %1394 = vmatprep.subr.mxu0 0.0
    %1395 = vmatpush1.msra.mxu0 0.0
    %1396 = vmatprep.subr.mxu0 0.0
    %1397 = vmatpush1.msra.mxu0 0.0
    %1398 = vmatprep.subr.mxu0 0.0
    %1399 = vmatpush1.msra.mxu0 0.0
    %1400 = vmatprep.subr.mxu0 0.0
    %1401 = vmatpush1.msra.mxu0 0.0
    %1402 = vmatprep.subr.mxu0 0.0
    %1403 = vmatpush1.msra.mxu0 0.0
    %1404 = vmatprep.subr.mxu0 0.0
    %1405 = vmatpush1.msra.mxu0 0.0
    %1406 = vmatprep.subr.mxu0 0.0
    %1407 = vmatpush1.msra.mxu0 0.0
    %1408 = vmatprep.subr.mxu0 0.0
    %1409 = vmatpush1.msra.mxu0 0.0
    %1410 = vmatprep.subr.mxu0 0.0
    %1411 = vmatpush1.msra.mxu0 0.0
    %1412 = vmatprep.subr.mxu0 0.0
    %1413 = vmatpush1.msra.mxu0 0.0
    %1414 = vmatprep.subr.mxu0 0.0
    %1415 = vmatpush1.msra.mxu0 0.0
    %1416 = vmatprep.subr.mxu0 0.0
    %1417 = vmatpush1.msra.mxu0 0.0
    %1418 = vmatprep.mubr.f32.mxu0 0.0
    %v1419 = vand.u32 %v103, 4294901760
    %1420 = vmatmul.mubr.f32.gmra.mrb[0].mxu0 %v1419
    %v1421 = vpop.f32.mrb[0].mxu0
    %v1422 = vadd.f32 %v1344, %v1421
    %v1423 = vpop.f32.mrb[0].mxu0
    %v1424 = vadd.f32 %v1346, %v1423
    %1425 = vdwg.mxu0
    %v1426 = vand.u32 %v56, 4294901760
    %1427 = vmatprep.subr.mxu0 %v1426
    %v1428 = vand.u32 %v55, 4294901760
    %1429 = vmatpush1.msra.mxu0 %v1428
    %1430 = vmatprep.subr.mxu0 0.0
    %1431 = vmatpush1.msra.mxu0 0.0
    %1432 = vmatprep.subr.mxu0 0.0
    %1433 = vmatpush1.msra.mxu0 0.0
    %1434 = vmatprep.subr.mxu0 0.0
    %1435 = vmatpush1.msra.mxu0 0.0
    %1436 = vmatprep.subr.mxu0 0.0
    %1437 = vmatpush1.msra.mxu0 0.0
    %1438 = vmatprep.subr.mxu0 0.0
    %1439 = vmatpush1.msra.mxu0 0.0
    %1440 = vmatprep.subr.mxu0 0.0
    %1441 = vmatpush1.msra.mxu0 0.0
    %1442 = vmatprep.subr.mxu0 0.0
    %1443 = vmatpush1.msra.mxu0 0.0
    %1444 = vmatprep.subr.mxu0 0.0
    %1445 = vmatpush1.msra.mxu0 0.0
    %1446 = vmatprep.subr.mxu0 0.0
    %1447 = vmatpush1.msra.mxu0 0.0
    %1448 = vmatprep.subr.mxu0 0.0
    %1449 = vmatpush1.msra.mxu0 0.0
    %1450 = vmatprep.subr.mxu0 0.0
    %1451 = vmatpush1.msra.mxu0 0.0
    %1452 = vmatprep.subr.mxu0 0.0
    %1453 = vmatpush1.msra.mxu0 0.0
    %1454 = vmatprep.subr.mxu0 0.0
    %1455 = vmatpush1.msra.mxu0 0.0
    %1456 = vmatprep.subr.mxu0 0.0
    %1457 = vmatpush1.msra.mxu0 0.0
    %1458 = vmatprep.subr.mxu0 0.0
    %1459 = vmatpush1.msra.mxu0 0.0
    %1460 = vmatprep.subr.mxu0 0.0
    %1461 = vmatpush1.msra.mxu0 0.0
    %1462 = vmatprep.subr.mxu0 0.0
    %1463 = vmatpush1.msra.mxu0 0.0
    %1464 = vmatprep.subr.mxu0 0.0
    %1465 = vmatpush1.msra.mxu0 0.0
    %1466 = vmatprep.subr.mxu0 0.0
    %1467 = vmatpush1.msra.mxu0 0.0
    %1468 = vmatprep.subr.mxu0 0.0
    %1469 = vmatpush1.msra.mxu0 0.0
    %1470 = vmatprep.subr.mxu0 0.0
    %1471 = vmatpush1.msra.mxu0 0.0
    %1472 = vmatprep.subr.mxu0 0.0
    %1473 = vmatpush1.msra.mxu0 0.0
    %1474 = vmatprep.subr.mxu0 0.0
    %1475 = vmatpush1.msra.mxu0 0.0
    %1476 = vmatprep.subr.mxu0 0.0
    %1477 = vmatpush1.msra.mxu0 0.0
    %1478 = vmatprep.subr.mxu0 0.0
    %1479 = vmatpush1.msra.mxu0 0.0
    %1480 = vmatprep.subr.mxu0 0.0
    %1481 = vmatpush1.msra.mxu0 0.0
    %1482 = vmatprep.subr.mxu0 0.0
    %1483 = vmatpush1.msra.mxu0 0.0
    %1484 = vmatprep.subr.mxu0 0.0
    %1485 = vmatpush1.msra.mxu0 0.0
    %1486 = vmatprep.subr.mxu0 0.0
    %1487 = vmatpush1.msra.mxu0 0.0
    %1488 = vmatprep.subr.mxu0 0.0
    %1489 = vmatpush1.msra.mxu0 0.0
    %1490 = vmatprep.subr.mxu0 0.0
    %1491 = vmatpush1.msra.mxu0 0.0
    %1492 = vmatprep.mubr.f32.mxu0 0.0
    %v1493 = vand.u32 %v103, 4294901760
    %1494 = vmatmul.mubr.f32.gmra.mrb[0].mxu0 %v1493
    %v1495 = vpop.f32.mrb[0].mxu0
    %v1496 = vadd.f32 %v1422, %v1495
    %v1497 = vpop.f32.mrb[0].mxu0
    %v1498 = vadd.f32 %v1424, %v1497
    %1499 = vdwg.mxu0
    %v1500 = vand.u32 %v58, 4294901760
    %1501 = vmatprep.subr.mxu0 %v1500
    %v1502 = vand.u32 %v57, 4294901760
    %1503 = vmatpush1.msra.mxu0 %v1502
    %1504 = vmatprep.subr.mxu0 0.0
    %1505 = vmatpush1.msra.mxu0 0.0
    %1506 = vmatprep.subr.mxu0 0.0
    %1507 = vmatpush1.msra.mxu0 0.0
    %1508 = vmatprep.subr.mxu0 0.0
    %1509 = vmatpush1.msra.mxu0 0.0
    %1510 = vmatprep.subr.mxu0 0.0
    %1511 = vmatpush1.msra.mxu0 0.0
    %1512 = vmatprep.subr.mxu0 0.0
    %1513 = vmatpush1.msra.mxu0 0.0
    %1514 = vmatprep.subr.mxu0 0.0
    %1515 = vmatpush1.msra.mxu0 0.0
    %1516 = vmatprep.subr.mxu0 0.0
    %1517 = vmatpush1.msra.mxu0 0.0
    %1518 = vmatprep.subr.mxu0 0.0
    %1519 = vmatpush1.msra.mxu0 0.0
    %1520 = vmatprep.subr.mxu0 0.0
    %1521 = vmatpush1.msra.mxu0 0.0
    %1522 = vmatprep.subr.mxu0 0.0
    %1523 = vmatpush1.msra.mxu0 0.0
    %1524 = vmatprep.subr.mxu0 0.0
    %1525 = vmatpush1.msra.mxu0 0.0
    %1526 = vmatprep.subr.mxu0 0.0
    %1527 = vmatpush1.msra.mxu0 0.0
    %1528 = vmatprep.subr.mxu0 0.0
    %1529 = vmatpush1.msra.mxu0 0.0
    %1530 = vmatprep.subr.mxu0 0.0
    %1531 = vmatpush1.msra.mxu0 0.0
    %1532 = vmatprep.subr.mxu0 0.0
    %1533 = vmatpush1.msra.mxu0 0.0
    %1534 = vmatprep.subr.mxu0 0.0
    %1535 = vmatpush1.msra.mxu0 0.0
    %1536 = vmatprep.subr.mxu0 0.0
    %1537 = vmatpush1.msra.mxu0 0.0
    %1538 = vmatprep.subr.mxu0 0.0
    %1539 = vmatpush1.msra.mxu0 0.0
    %1540 = vmatprep.subr.mxu0 0.0
    %1541 = vmatpush1.msra.mxu0 0.0
    %1542 = vmatprep.subr.mxu0 0.0
    %1543 = vmatpush1.msra.mxu0 0.0
    %1544 = vmatprep.subr.mxu0 0.0
    %1545 = vmatpush1.msra.mxu0 0.0
    %1546 = vmatprep.subr.mxu0 0.0
    %1547 = vmatpush1.msra.mxu0 0.0
    %1548 = vmatprep.subr.mxu0 0.0
    %1549 = vmatpush1.msra.mxu0 0.0
    %1550 = vmatprep.subr.mxu0 0.0
    %1551 = vmatpush1.msra.mxu0 0.0
    %1552 = vmatprep.subr.mxu0 0.0
    %1553 = vmatpush1.msra.mxu0 0.0
    %1554 = vmatprep.subr.mxu0 0.0
    %1555 = vmatpush1.msra.mxu0 0.0
    %1556 = vmatprep.subr.mxu0 0.0
    %1557 = vmatpush1.msra.mxu0 0.0
    %1558 = vmatprep.subr.mxu0 0.0
    %1559 = vmatpush1.msra.mxu0 0.0
    %1560 = vmatprep.subr.mxu0 0.0
    %1561 = vmatpush1.msra.mxu0 0.0
    %1562 = vmatprep.subr.mxu0 0.0
    %1563 = vmatpush1.msra.mxu0 0.0
    %1564 = vmatprep.subr.mxu0 0.0
    %1565 = vmatpush1.msra.mxu0 0.0
    %1566 = vmatprep.mubr.f32.mxu0 0.0
    %v1567 = vand.u32 %v103, 4294901760
    %v1568 = vsub.f32 %v103, %v1567
    %v1569 = vand.u32 %v1568, 4294901760
    %v1570 = vsub.f32 %v1568, %v1569
    %v1571 = vand.u32 %v1570, 4294901760
    %1572 = vmatmul.mubr.f32.gmra.mrb[0].mxu0 %v1571
    %v1573 = vpop.f32.mrb[0].mxu0
    %v1574 = vadd.f32 %v88, %v1573
    %v1575 = vpop.f32.mrb[0].mxu0
    %v1576 = vadd.f32 %v92, %v1575
    %1577 = vdwg.mxu0
    %v1578 = vand.u32 %v58, 4294901760
    %v1579 = vsub.f32 %v58, %v1578
    %v1580 = vand.u32 %v1579, 4294901760
    %v1581 = vsub.f32 %v1579, %v1580
    %v1582 = vand.u32 %v1581, 4294901760
    %1583 = vmatprep.subr.mxu0 %v1582
    %v1584 = vand.u32 %v57, 4294901760
    %v1585 = vsub.f32 %v57, %v1584
    %v1586 = vand.u32 %v1585, 4294901760
    %v1587 = vsub.f32 %v1585, %v1586
    %v1588 = vand.u32 %v1587, 4294901760
    %1589 = vmatpush1.msra.mxu0 %v1588
    %1590 = vmatprep.subr.mxu0 0.0
    %1591 = vmatpush1.msra.mxu0 0.0
    %1592 = vmatprep.subr.mxu0 0.0
    %1593 = vmatpush1.msra.mxu0 0.0
    %1594 = vmatprep.subr.mxu0 0.0
    %1595 = vmatpush1.msra.mxu0 0.0
    %1596 = vmatprep.subr.mxu0 0.0
    %1597 = vmatpush1.msra.mxu0 0.0
    %1598 = vmatprep.subr.mxu0 0.0
    %1599 = vmatpush1.msra.mxu0 0.0
    %1600 = vmatprep.subr.mxu0 0.0
    %1601 = vmatpush1.msra.mxu0 0.0
    %1602 = vmatprep.subr.mxu0 0.0
    %1603 = vmatpush1.msra.mxu0 0.0
    %1604 = vmatprep.subr.mxu0 0.0
    %1605 = vmatpush1.msra.mxu0 0.0
    %1606 = vmatprep.subr.mxu0 0.0
    %1607 = vmatpush1.msra.mxu0 0.0
    %1608 = vmatprep.subr.mxu0 0.0
    %1609 = vmatpush1.msra.mxu0 0.0
    %1610 = vmatprep.subr.mxu0 0.0
    %1611 = vmatpush1.msra.mxu0 0.0
    %1612 = vmatprep.subr.mxu0 0.0
    %1613 = vmatpush1.msra.mxu0 0.0
    %1614 = vmatprep.subr.mxu0 0.0
    %1615 = vmatpush1.msra.mxu0 0.0
    %1616 = vmatprep.subr.mxu0 0.0
    %1617 = vmatpush1.msra.mxu0 0.0
    %1618 = vmatprep.subr.mxu0 0.0
    %1619 = vmatpush1.msra.mxu0 0.0
    %1620 = vmatprep.subr.mxu0 0.0
    %1621 = vmatpush1.msra.mxu0 0.0
    %1622 = vmatprep.subr.mxu0 0.0
    %1623 = vmatpush1.msra.mxu0 0.0
    %1624 = vmatprep.subr.mxu0 0.0
    %1625 = vmatpush1.msra.mxu0 0.0
    %1626 = vmatprep.subr.mxu0 0.0
    %1627 = vmatpush1.msra.mxu0 0.0
    %1628 = vmatprep.subr.mxu0 0.0
    %1629 = vmatpush1.msra.mxu0 0.0
    %1630 = vmatprep.subr.mxu0 0.0
    %1631 = vmatpush1.msra.mxu0 0.0
    %1632 = vmatprep.subr.mxu0 0.0
    %1633 = vmatpush1.msra.mxu0 0.0
    %1634 = vmatprep.subr.mxu0 0.0
    %1635 = vmatpush1.msra.mxu0 0.0
    %1636 = vmatprep.subr.mxu0 0.0
    %1637 = vmatpush1.msra.mxu0 0.0
    %1638 = vmatprep.subr.mxu0 0.0
    %1639 = vmatpush1.msra.mxu0 0.0
    %1640 = vmatprep.subr.mxu0 0.0
    %1641 = vmatpush1.msra.mxu0 0.0
    %1642 = vmatprep.subr.mxu0 0.0
    %1643 = vmatpush1.msra.mxu0 0.0
    %1644 = vmatprep.subr.mxu0 0.0
    %1645 = vmatpush1.msra.mxu0 0.0
    %1646 = vmatprep.subr.mxu0 0.0
    %1647 = vmatpush1.msra.mxu0 0.0
    %1648 = vmatprep.subr.mxu0 0.0
    %1649 = vmatpush1.msra.mxu0 0.0
    %1650 = vmatprep.subr.mxu0 0.0
    %1651 = vmatpush1.msra.mxu0 0.0
    %1652 = vmatprep.mubr.f32.mxu0 0.0
    %v1653 = vand.u32 %v103, 4294901760
    %1654 = vmatmul.mubr.f32.gmra.mrb[0].mxu0 %v1653
    %v1655 = vpop.f32.mrb[0].mxu0
    %v1656 = vadd.f32 %v1574, %v1655
    %v1657 = vpop.f32.mrb[0].mxu0
    %v1658 = vadd.f32 %v1576, %v1657
    %1659 = vdwg.mxu0
    %v1660 = vand.u32 %v58, 4294901760
    %v1661 = vsub.f32 %v58, %v1660
    %1662 = vmatprep.subr.mxu0 %v1661
    %v1663 = vand.u32 %v57, 4294901760
    %v1664 = vsub.f32 %v57, %v1663
    %1665 = vmatpush1.msra.mxu0 %v1664
    %1666 = vmatprep.subr.mxu0 0.0
    %1667 = vmatpush1.msra.mxu0 0.0
    %1668 = vmatprep.subr.mxu0 0.0
    %1669 = vmatpush1.msra.mxu0 0.0
    %1670 = vmatprep.subr.mxu0 0.0
    %1671 = vmatpush1.msra.mxu0 0.0
    %1672 = vmatprep.subr.mxu0 0.0
    %1673 = vmatpush1.msra.mxu0 0.0
    %1674 = vmatprep.subr.mxu0 0.0
    %1675 = vmatpush1.msra.mxu0 0.0
    %1676 = vmatprep.subr.mxu0 0.0
    %1677 = vmatpush1.msra.mxu0 0.0
    %1678 = vmatprep.subr.mxu0 0.0
    %1679 = vmatpush1.msra.mxu0 0.0
    %1680 = vmatprep.subr.mxu0 0.0
    %1681 = vmatpush1.msra.mxu0 0.0
    %1682 = vmatprep.subr.mxu0 0.0
    %1683 = vmatpush1.msra.mxu0 0.0
    %1684 = vmatprep.subr.mxu0 0.0
    %1685 = vmatpush1.msra.mxu0 0.0
    %1686 = vmatprep.subr.mxu0 0.0
    %1687 = vmatpush1.msra.mxu0 0.0
    %1688 = vmatprep.subr.mxu0 0.0
    %1689 = vmatpush1.msra.mxu0 0.0
    %1690 = vmatprep.subr.mxu0 0.0
    %1691 = vmatpush1.msra.mxu0 0.0
    %1692 = vmatprep.subr.mxu0 0.0
    %1693 = vmatpush1.msra.mxu0 0.0
    %1694 = vmatprep.subr.mxu0 0.0
    %1695 = vmatpush1.msra.mxu0 0.0
    %1696 = vmatprep.subr.mxu0 0.0
    %1697 = vmatpush1.msra.mxu0 0.0
    %1698 = vmatprep.subr.mxu0 0.0
    %1699 = vmatpush1.msra.mxu0 0.0
    %1700 = vmatprep.subr.mxu0 0.0
    %1701 = vmatpush1.msra.mxu0 0.0
    %1702 = vmatprep.subr.mxu0 0.0
    %1703 = vmatpush1.msra.mxu0 0.0
    %1704 = vmatprep.subr.mxu0 0.0
    %1705 = vmatpush1.msra.mxu0 0.0
    %1706 = vmatprep.subr.mxu0 0.0
    %1707 = vmatpush1.msra.mxu0 0.0
    %1708 = vmatprep.subr.mxu0 0.0
    %1709 = vmatpush1.msra.mxu0 0.0
    %1710 = vmatprep.subr.mxu0 0.0
    %1711 = vmatpush1.msra.mxu0 0.0
    %1712 = vmatprep.subr.mxu0 0.0
    %1713 = vmatpush1.msra.mxu0 0.0
    %1714 = vmatprep.subr.mxu0 0.0
    %1715 = vmatpush1.msra.mxu0 0.0
    %1716 = vmatprep.subr.mxu0 0.0
    %1717 = vmatpush1.msra.mxu0 0.0
    %1718 = vmatprep.subr.mxu0 0.0
    %1719 = vmatpush1.msra.mxu0 0.0
    %1720 = vmatprep.subr.mxu0 0.0
    %1721 = vmatpush1.msra.mxu0 0.0
    %1722 = vmatprep.subr.mxu0 0.0
    %1723 = vmatpush1.msra.mxu0 0.0
    %1724 = vmatprep.subr.mxu0 0.0
    %1725 = vmatpush1.msra.mxu0 0.0
    %1726 = vmatprep.subr.mxu0 0.0
    %1727 = vmatpush1.msra.mxu0 0.0
    %1728 = vmatprep.mubr.f32.mxu0 0.0
    %v1729 = vand.u32 %v103, 4294901760
    %v1730 = vsub.f32 %v103, %v1729
    %1731 = vmatmul.mubr.f32.gmra.mrb[0].mxu0 %v1730
    %v1732 = vpop.f32.mrb[0].mxu0
    %v1733 = vadd.f32 %v1656, %v1732
    %v1734 = vpop.f32.mrb[0].mxu0
    %v1735 = vadd.f32 %v1658, %v1734
    %1736 = vdwg.mxu0
    %v1737 = vand.u32 %v58, 4294901760
    %1738 = vmatprep.subr.mxu0 %v1737
    %v1739 = vand.u32 %v57, 4294901760
    %1740 = vmatpush1.msra.mxu0 %v1739
    %1741 = vmatprep.subr.mxu0 0.0
    %1742 = vmatpush1.msra.mxu0 0.0
    %1743 = vmatprep.subr.mxu0 0.0
    %1744 = vmatpush1.msra.mxu0 0.0
    %1745 = vmatprep.subr.mxu0 0.0
    %1746 = vmatpush1.msra.mxu0 0.0
    %1747 = vmatprep.subr.mxu0 0.0
    %1748 = vmatpush1.msra.mxu0 0.0
    %1749 = vmatprep.subr.mxu0 0.0
    %1750 = vmatpush1.msra.mxu0 0.0
    %1751 = vmatprep.subr.mxu0 0.0
    %1752 = vmatpush1.msra.mxu0 0.0
    %1753 = vmatprep.subr.mxu0 0.0
    %1754 = vmatpush1.msra.mxu0 0.0
    %1755 = vmatprep.subr.mxu0 0.0
    %1756 = vmatpush1.msra.mxu0 0.0
    %1757 = vmatprep.subr.mxu0 0.0
    %1758 = vmatpush1.msra.mxu0 0.0
    %1759 = vmatprep.subr.mxu0 0.0
    %1760 = vmatpush1.msra.mxu0 0.0
    %1761 = vmatprep.subr.mxu0 0.0
    %1762 = vmatpush1.msra.mxu0 0.0
    %1763 = vmatprep.subr.mxu0 0.0
    %1764 = vmatpush1.msra.mxu0 0.0
    %1765 = vmatprep.subr.mxu0 0.0
    %1766 = vmatpush1.msra.mxu0 0.0
    %1767 = vmatprep.subr.mxu0 0.0
    %1768 = vmatpush1.msra.mxu0 0.0
    %1769 = vmatprep.subr.mxu0 0.0
    %1770 = vmatpush1.msra.mxu0 0.0
    %1771 = vmatprep.subr.mxu0 0.0
    %1772 = vmatpush1.msra.mxu0 0.0
    %1773 = vmatprep.subr.mxu0 0.0
    %1774 = vmatpush1.msra.mxu0 0.0
    %1775 = vmatprep.subr.mxu0 0.0
    %1776 = vmatpush1.msra.mxu0 0.0
    %1777 = vmatprep.subr.mxu0 0.0
    %1778 = vmatpush1.msra.mxu0 0.0
    %1779 = vmatprep.subr.mxu0 0.0
    %1780 = vmatpush1.msra.mxu0 0.0
    %1781 = vmatprep.subr.mxu0 0.0
    %1782 = vmatpush1.msra.mxu0 0.0
    %1783 = vmatprep.subr.mxu0 0.0
    %1784 = vmatpush1.msra.mxu0 0.0
    %1785 = vmatprep.subr.mxu0 0.0
    %1786 = vmatpush1.msra.mxu0 0.0
    %1787 = vmatprep.subr.mxu0 0.0
    %1788 = vmatpush1.msra.mxu0 0.0
    %1789 = vmatprep.subr.mxu0 0.0
    %1790 = vmatpush1.msra.mxu0 0.0
    %1791 = vmatprep.subr.mxu0 0.0
    %1792 = vmatpush1.msra.mxu0 0.0
    %1793 = vmatprep.subr.mxu0 0.0
    %1794 = vmatpush1.msra.mxu0 0.0
    %1795 = vmatprep.subr.mxu0 0.0
    %1796 = vmatpush1.msra.mxu0 0.0
    %1797 = vmatprep.subr.mxu0 0.0
    %1798 = vmatpush1.msra.mxu0 0.0
    %1799 = vmatprep.subr.mxu0 0.0
    %1800 = vmatpush1.msra.mxu0 0.0
    %1801 = vmatprep.subr.mxu0 0.0
    %1802 = vmatpush1.msra.mxu0 0.0
    %1803 = vmatprep.mubr.f32.mxu0 0.0
    %v1804 = vand.u32 %v103, 4294901760
    %v1805 = vsub.f32 %v103, %v1804
    %v1806 = vand.u32 %v1805, 4294901760
    %1807 = vmatmul.mubr.f32.gmra.mrb[0].mxu0 %v1806
    %v1808 = vpop.f32.mrb[0].mxu0
    %v1809 = vadd.f32 %v1733, %v1808
    %v1810 = vpop.f32.mrb[0].mxu0
    %v1811 = vadd.f32 %v1735, %v1810
    %1812 = vdwg.mxu0
    %v1813 = vand.u32 %v58, 4294901760
    %v1814 = vsub.f32 %v58, %v1813
    %v1815 = vand.u32 %v1814, 4294901760
    %1816 = vmatprep.subr.mxu0 %v1815
    %v1817 = vand.u32 %v57, 4294901760
    %v1818 = vsub.f32 %v57, %v1817
    %v1819 = vand.u32 %v1818, 4294901760
    %1820 = vmatpush1.msra.mxu0 %v1819
    %1821 = vmatprep.subr.mxu0 0.0
    %1822 = vmatpush1.msra.mxu0 0.0
    %1823 = vmatprep.subr.mxu0 0.0
    %1824 = vmatpush1.msra.mxu0 0.0
    %1825 = vmatprep.subr.mxu0 0.0
    %1826 = vmatpush1.msra.mxu0 0.0
    %1827 = vmatprep.subr.mxu0 0.0
    %1828 = vmatpush1.msra.mxu0 0.0
    %1829 = vmatprep.subr.mxu0 0.0
    %1830 = vmatpush1.msra.mxu0 0.0
    %1831 = vmatprep.subr.mxu0 0.0
    %1832 = vmatpush1.msra.mxu0 0.0
    %1833 = vmatprep.subr.mxu0 0.0
    %1834 = vmatpush1.msra.mxu0 0.0
    %1835 = vmatprep.subr.mxu0 0.0
    %1836 = vmatpush1.msra.mxu0 0.0
    %1837 = vmatprep.subr.mxu0 0.0
    %1838 = vmatpush1.msra.mxu0 0.0
    %1839 = vmatprep.subr.mxu0 0.0
    %1840 = vmatpush1.msra.mxu0 0.0
    %1841 = vmatprep.subr.mxu0 0.0
    %1842 = vmatpush1.msra.mxu0 0.0
    %1843 = vmatprep.subr.mxu0 0.0
    %1844 = vmatpush1.msra.mxu0 0.0
    %1845 = vmatprep.subr.mxu0 0.0
    %1846 = vmatpush1.msra.mxu0 0.0
    %1847 = vmatprep.subr.mxu0 0.0
    %1848 = vmatpush1.msra.mxu0 0.0
    %1849 = vmatprep.subr.mxu0 0.0
    %1850 = vmatpush1.msra.mxu0 0.0
    %1851 = vmatprep.subr.mxu0 0.0
    %1852 = vmatpush1.msra.mxu0 0.0
    %1853 = vmatprep.subr.mxu0 0.0
    %1854 = vmatpush1.msra.mxu0 0.0
    %1855 = vmatprep.subr.mxu0 0.0
    %1856 = vmatpush1.msra.mxu0 0.0
    %1857 = vmatprep.subr.mxu0 0.0
    %1858 = vmatpush1.msra.mxu0 0.0
    %1859 = vmatprep.subr.mxu0 0.0
    %1860 = vmatpush1.msra.mxu0 0.0
    %1861 = vmatprep.subr.mxu0 0.0
    %1862 = vmatpush1.msra.mxu0 0.0
    %1863 = vmatprep.subr.mxu0 0.0
    %1864 = vmatpush1.msra.mxu0 0.0
    %1865 = vmatprep.subr.mxu0 0.0
    %1866 = vmatpush1.msra.mxu0 0.0
    %1867 = vmatprep.subr.mxu0 0.0
    %1868 = vmatpush1.msra.mxu0 0.0
    %1869 = vmatprep.subr.mxu0 0.0
    %1870 = vmatpush1.msra.mxu0 0.0
    %1871 = vmatprep.subr.mxu0 0.0
    %1872 = vmatpush1.msra.mxu0 0.0
    %1873 = vmatprep.subr.mxu0 0.0
    %1874 = vmatpush1.msra.mxu0 0.0
    %1875 = vmatprep.subr.mxu0 0.0
    %1876 = vmatpush1.msra.mxu0 0.0
    %1877 = vmatprep.subr.mxu0 0.0
    %1878 = vmatpush1.msra.mxu0 0.0
    %1879 = vmatprep.subr.mxu0 0.0
    %1880 = vmatpush1.msra.mxu0 0.0
    %1881 = vmatprep.subr.mxu0 0.0
    %1882 = vmatpush1.msra.mxu0 0.0
    %1883 = vmatprep.mubr.f32.mxu0 0.0
    %v1884 = vand.u32 %v103, 4294901760
    %1885 = vmatmul.mubr.f32.gmra.mrb[0].mxu0 %v1884
    %v1886 = vpop.f32.mrb[0].mxu0
    %v1887 = vadd.f32 %v1809, %v1886
    %v1888 = vpop.f32.mrb[0].mxu0
    %v1889 = vadd.f32 %v1811, %v1888
    %1890 = vdwg.mxu0
    %v1891 = vand.u32 %v58, 4294901760
    %1892 = vmatprep.subr.mxu0 %v1891
    %v1893 = vand.u32 %v57, 4294901760
    %1894 = vmatpush1.msra.mxu0 %v1893
    %1895 = vmatprep.subr.mxu0 0.0
    %1896 = vmatpush1.msra.mxu0 0.0
    %1897 = vmatprep.subr.mxu0 0.0
    %1898 = vmatpush1.msra.mxu0 0.0
    %1899 = vmatprep.subr.mxu0 0.0
    %1900 = vmatpush1.msra.mxu0 0.0
    %1901 = vmatprep.subr.mxu0 0.0
    %1902 = vmatpush1.msra.mxu0 0.0
    %1903 = vmatprep.subr.mxu0 0.0
    %1904 = vmatpush1.msra.mxu0 0.0
    %1905 = vmatprep.subr.mxu0 0.0
    %1906 = vmatpush1.msra.mxu0 0.0
    %1907 = vmatprep.subr.mxu0 0.0
    %1908 = vmatpush1.msra.mxu0 0.0
    %1909 = vmatprep.subr.mxu0 0.0
    %1910 = vmatpush1.msra.mxu0 0.0
    %1911 = vmatprep.subr.mxu0 0.0
    %1912 = vmatpush1.msra.mxu0 0.0
    %1913 = vmatprep.subr.mxu0 0.0
    %1914 = vmatpush1.msra.mxu0 0.0
    %1915 = vmatprep.subr.mxu0 0.0
    %1916 = vmatpush1.msra.mxu0 0.0
    %1917 = vmatprep.subr.mxu0 0.0
    %1918 = vmatpush1.msra.mxu0 0.0
    %1919 = vmatprep.subr.mxu0 0.0
    %1920 = vmatpush1.msra.mxu0 0.0
    %1921 = vmatprep.subr.mxu0 0.0
    %1922 = vmatpush1.msra.mxu0 0.0
    %1923 = vmatprep.subr.mxu0 0.0
    %1924 = vmatpush1.msra.mxu0 0.0
    %1925 = vmatprep.subr.mxu0 0.0
    %1926 = vmatpush1.msra.mxu0 0.0
    %1927 = vmatprep.subr.mxu0 0.0
    %1928 = vmatpush1.msra.mxu0 0.0
    %1929 = vmatprep.subr.mxu0 0.0
    %1930 = vmatpush1.msra.mxu0 0.0
    %1931 = vmatprep.subr.mxu0 0.0
    %1932 = vmatpush1.msra.mxu0 0.0
    %1933 = vmatprep.subr.mxu0 0.0
    %1934 = vmatpush1.msra.mxu0 0.0
    %1935 = vmatprep.subr.mxu0 0.0
    %1936 = vmatpush1.msra.mxu0 0.0
    %1937 = vmatprep.subr.mxu0 0.0
    %1938 = vmatpush1.msra.mxu0 0.0
    %1939 = vmatprep.subr.mxu0 0.0
    %1940 = vmatpush1.msra.mxu0 0.0
    %1941 = vmatprep.subr.mxu0 0.0
    %1942 = vmatpush1.msra.mxu0 0.0
    %1943 = vmatprep.subr.mxu0 0.0
    %1944 = vmatpush1.msra.mxu0 0.0
    %1945 = vmatprep.subr.mxu0 0.0
    %1946 = vmatpush1.msra.mxu0 0.0
    %1947 = vmatprep.subr.mxu0 0.0
    %1948 = vmatpush1.msra.mxu0 0.0
    %1949 = vmatprep.subr.mxu0 0.0
    %1950 = vmatpush1.msra.mxu0 0.0
    %1951 = vmatprep.subr.mxu0 0.0
    %1952 = vmatpush1.msra.mxu0 0.0
    %1953 = vmatprep.subr.mxu0 0.0
    %1954 = vmatpush1.msra.mxu0 0.0
    %1955 = vmatprep.subr.mxu0 0.0
    %1956 = vmatpush1.msra.mxu0 0.0
    %1957 = vmatprep.mubr.f32.mxu0 0.0
    %v1958 = vand.u32 %v103, 4294901760
    %1959 = vmatmul.mubr.f32.gmra.mrb[0].mxu0 %v1958
    %v1960 = vpop.f32.mrb[0].mxu0
    %v1961 = vadd.f32 %v1887, %v1960
    %v1962 = vpop.f32.mrb[0].mxu0
    %v1963 = vadd.f32 %v1889, %v1962
    %1964 = vdwg.mxu0
    %v1973 = vcombine.low %v566, %v568
    %v1974 = vcombine.low %v1031, %v1033
    %v1976 = vunpack.c.l.s4 1983009808
    %v1977 = vunpack.c.0.s8 %v1976
    %v1978 = vlaneseq
    %v1979 = vshrl.u32 %v1978, 7
    %v1980 = vsub.s32 %v1977, %v1979
    %v1981 = vrot.slane %v1973, %v1980
    %v1983 = vunpack.c.l.s4 1983009808
    %v1984 = vunpack.c.0.s8 %v1983
    %v1985 = vlaneseq
    %v1986 = vshrl.u32 %v1985, 7
    %v1987 = vsub.s32 %v1984, %v1986
    %v1988 = vrot.slane %v1974, %v1987
    %v1989 = vcombine.low %v1981, %v1988
    %v1990 = vcombine.low %v1496, %v1498
    %v1991 = vcombine.low %v1961, %v1963
    %v1993 = vunpack.c.l.s4 1983009808
    %v1994 = vunpack.c.0.s8 %v1993
    %v1995 = vlaneseq
    %v1996 = vshrl.u32 %v1995, 7
    %v1997 = vsub.s32 %v1994, %v1996
    %v1998 = vrot.slane %v1990, %v1997
    %v2000 = vunpack.c.l.s4 1983009808
    %v2001 = vunpack.c.0.s8 %v2000
    %v2002 = vlaneseq
    %v2003 = vshrl.u32 %v2002, 7
    %v2004 = vsub.s32 %v2001, %v2003
    %v2005 = vrot.slane %v1991, %v2004
    %v2006 = vcombine.low %v1998, %v2005
    %2009 = vst [vmem:[#allocation8] sm:$0xff] %v1989
    %vm2010 = vcmask 1041408
    %vm2011 = vcmask 1043458
    %vm2012 = vmor %vm2011, %vm2010
    %vm2013 = vcmask 1045508
    %vm2014 = vmor %vm2013, %vm2012
    %vm2015 = vcmask 850950
    %vm2016 = vmor %vm2015, %vm2014
    %2017 = vst.msk [vmem:[#allocation8 + $0x8] sm:$0xff] %vm2016, %v2006
    // Predicated region
    $region26: #{tpu_custom_call.1} parent=1 // pred_check
      _
    $region27: #{tpu_custom_call.1} parent=1 // pred_check_branch
      %2019 = sbr.rel (0) target = $region29
    $region28: #{tpu_custom_call.1} parent=1 // pred_region
      %s2021 = ssub.s32 256, 256
      %2022 = vsyncadd [#allocation4], %s2021
      %s2024 = sshll.u32 [#allocation8], 4
      %s2025 = int_to_ptr.vmem [resolvable:$true] %s2024
      %2027 = dma.vmem_to_hbm [thread:$0]  %s2025, 256, %s3, [#allocation4]
    $region29: #{tpu_custom_call.1} parent=1 // pred_fallthru
      _
    // Predicated region
    $region30: #{tpu_custom_call.1} parent=1 // pred_check
      _
    $region31: #{tpu_custom_call.1} parent=1 // pred_check_branch
      %2029 = sbr.rel (0) target = $region33
    $region32: #{tpu_custom_call.1} parent=1 // pred_region
      %2030 = dma.done [#allocation4], 256
    $region33: #{tpu_custom_call.1} parent=1 // pred_fallthru
      _
    %2031 = vsyncpa [#allocation3], 1
    %2032 = vsyncpa [#allocation6], 1
    %2033 = vsyncpa [#allocation4], 1

</llo_original>
